<compile_context>
chip_gen: v5e
topology: v5e:2x2
jax: 0.10.0
libtpu: 0.0.40
codegen_flags: <defaults>
</compile_context>

<pallas_src>
import functools

import numpy as np

import jax
import jax.numpy as jnp
from jax.experimental import pallas as pl
from jax.experimental.pallas import tpu as pltpu


# ----------------------------------------------------------------------------
# In-kernel helpers (all shapes static)
# ----------------------------------------------------------------------------
def _shift_dn(p, keep):
    """y[r, :] = p[r-1, :] (0 at per-batch block start, via `keep` mask)."""
    rolled = jnp.concatenate([jnp.zeros_like(p[:1]), p[:-1]], axis=0)
    return rolled * keep


def _shift_up(p, keep):
    """y[r, :] = p[r+1, :] (0 at per-batch block end, via `keep` mask)."""
    rolled = jnp.concatenate([p[1:], jnp.zeros_like(p[:1])], axis=0)
    return rolled * keep


# ----------------------------------------------------------------------------
# Fused decoder kernel
# ----------------------------------------------------------------------------
def _decoder2_kernel(zx_ref, w0_ref, b0_ref, g0_ref, be0_ref, pbn_ref,
                     w1b_ref, b1_ref, w2b_ref, b2_ref, out_ref,
                     *, n_batch, h0, x1w, outw):
    f32 = jnp.float32

    # Per-batch-block row masks for the h-shifts (rows are n*h0 + q).
    ridx = jax.lax.broadcasted_iota(jnp.int32, (n_batch * h0, 1), 0) % h0
    keep_dn = (ridx != 0).astype(f32)
    keep_up = (ridx != h0 - 1).astype(f32)

    # ---- fc: single MXU matmul on the block-diagonal latent slab -------------
    # zx[n*h0+oh, j*latent+ci] = z[n,ci]*[j==oh];  w0[j*latent+ci, ow*C0+co]
    x0 = jnp.dot(zx_ref[...], w0_ref[...], preferred_element_type=f32) + b0_ref[...]

    # ---- BatchNorm2d(C0): training-mode biased batch stats over (N, H, W) ----
    cnt = float(n_batch * h0 * h0)
    stats = jnp.concatenate(
        [jnp.sum(x0, axis=0, keepdims=True),
         jnp.sum(x0 * x0, axis=0, keepdims=True)], axis=0)           # (2, h0*C0)
    tot = jnp.dot(stats, pbn_ref[...], preferred_element_type=f32) * (1.0 / cnt)
    mean = tot[0:1, :]                                               # lane-tiled
    var = jnp.maximum(tot[1:2, :] - mean * mean, 0.0)
    x0 = (x0 - mean) * jax.lax.rsqrt(var + 1e-5) * g0_ref[...] + be0_ref[...]
    # (Decoder2 has no activation after fc)

    # ---- layer1: ConvTranspose2d(32->16, K4 s2 p1) + ReLU, 7x7 -> 14x14 ------
    # One fused banded matmul; output is a phase-major slab
    #   x1[n*h0+q, rh*224 + ow*16 + co] = relu(y1[n, co, 2q+rh, ow]),
    # padded to 512 lanes.  Row shifts are applied to the product.
    p1 = jnp.dot(x0, w1b_ref[...], preferred_element_type=f32)       # (N*h0, 3*x1w)
    x1 = jnp.maximum(
        p1[:, 0:x1w]
        + _shift_dn(p1[:, x1w:2 * x1w], keep_dn)
        + _shift_up(p1[:, 2 * x1w:3 * x1w], keep_up)
        + b1_ref[...], 0.0)                                          # (N*h0, x1w)

    # ---- layer2: ConvTranspose2d(16->1, K4 s2 p1) + ReLU, 14 -> 28 -----------
    # The banded RHS consumes the phase-major slab directly and emits the final
    # lane-dense output slab: out[n*h0+q, p*28+ow] = img[n, 0, 4q+p, ow].
    p2 = jnp.dot(x1, w2b_ref[...], preferred_element_type=f32)       # (N*h0, 3*outw)
    out_ref[...] = jnp.maximum(
        p2[:, 0:outw]
        + _shift_dn(p2[:, outw:2 * outw], keep_dn)
        + _shift_up(p2[:, 2 * outw:3 * outw], keep_up)
        + b2_ref[...], 0.0)


# ----------------------------------------------------------------------------
# Weight preparation (pure layout work on tiny tensors, outside the kernel)
# ----------------------------------------------------------------------------
def _band_mats(w, in_w):
    """Per-kernel-row banded width-mixing matrices for ConvTranspose2d(K=4,s=2,p=1).

    Returns a list M[kh], each (in_w*Cin, 2*in_w*Cout), with
      M[kh][iw*Cin+ci, ow*Cout+co] = w[ci, co, kh, ow - 2*iw + 1]   (0 if tap OOB)
    so a (rows, in_w*Cin) activation slab times M[kh] gives the kh-row
    contribution in (rows, out_w*Cout) layout.
    """
    cin, cout, K, _ = w.shape
    stride, pad = 2, 1
    assert K == 4, "banded decomposition specialized to K=4, s=2, p=1"
    out_w = (in_w - 1) * stride - 2 * pad + K
    sel = np.zeros((in_w, out_w, K), np.float32)
    for iw in range(in_w):
        for kw in range(K):
            ow = iw * stride - pad + kw
            if 0 <= ow < out_w:
                sel[iw, ow, kw] = 1.0
    sel = jnp.asarray(sel)
    mats = []
    for kh in range(K):
        wk = w[:, :, kh, :]                                          # (cin, cout, K)
        m = jnp.einsum("iok,cdk->icod", sel, wk)                     # (iw,ci,ow,co)
        mats.append(m.reshape(in_w * cin, out_w * cout))
    return mats


def _ceil128(x):
    return ((x + 127) // 128) * 128


# ----------------------------------------------------------------------------
# Decoder2 forward (single fused pallas_call)
# ----------------------------------------------------------------------------
def decoder2_forward(params, z):
    """Decoder2.forward: z (N, latent) -> (N, 1, 28, 28), NCHW."""
    n, latent = z.shape
    f32 = jnp.float32
    w0 = params["fc"]["w"]                    # (latent, C0, 7, 7)
    w1 = params["layer1"]["w"]                # (C0, C1, 4, 4)
    w2 = params["layer2"]["w"]                # (C1, C2, 4, 4)
    c0, h0 = w0.shape[1], w0.shape[2]         # 32, 7
    c1 = w1.shape[1]                          # 16
    c2 = w2.shape[1]                          # 1
    h1, h2 = 2 * h0, 4 * h0                   # 14, 28

    # --- fc: weight (h0*latent, h0*C0); z as block-diagonal slab (layout only) -
    w0m = jnp.transpose(w0, (2, 0, 3, 1)).reshape(h0 * latent, h0 * c0)
    z_exp = jnp.einsum("nc,oj->nojc", z,
                       jnp.eye(h0, dtype=f32)).reshape(n * h0, h0 * latent)
    b0_t = jnp.tile(params["fc"]["b"], h0).reshape(1, h0 * c0)
    g0_t = jnp.tile(params["fc"]["gamma"], h0).reshape(1, h0 * c0)
    be0_t = jnp.tile(params["fc"]["beta"], h0).reshape(1, h0 * c0)
    # BN channel-reduce + lane-tile matrix: P[ow*C0+c, ow'*C0+c'] = [c == c'].
    pbn = jnp.asarray(np.tile(np.eye(c0, dtype=np.float32), (h0, h0)))

    # --- layer1 fused banded RHS:  [ main(phase0|phase1) | dn part | up part ] -
    # each block padded to x1w = ceil128(2*h1*c1) lanes so slices are aligned.
    M1 = _band_mats(w1, h0)                           # 4 x (h0*c0, h1*c1)
    half1 = h1 * c1                                   # 224
    x1w = _ceil128(2 * half1)                         # 512
    zpad1 = jnp.zeros((h0 * c0, x1w - 2 * half1), f32)
    zhalf1 = jnp.zeros((h0 * c0, half1), f32)
    B1 = jnp.concatenate(
        [M1[1], M1[2], zpad1,            # main: phase0 (kh=1) | phase1 (kh=2)
         M1[3], zhalf1, zpad1,           # shift-dn: kh=3 feeds phase 0
         zhalf1, M1[0], zpad1],          # shift-up: kh=0 feeds phase 1
        axis=1)                                       # (h0*c0, 3*x1w)
    bias1 = jnp.concatenate(
        [jnp.tile(params["layer1"]["b"], 2 * h1),
         jnp.zeros((x1w - 2 * half1,), f32)]).reshape(1, x1w)

    # --- layer2 fused banded RHS over the phase-major x1 slab ------------------
    # output col = p*28 + ow (p = output-row phase 0..3), padded to outw lanes.
    M2 = _band_mats(w2, h1)                           # 4 x (h1*c1, h2*c2)
    wo = h2 * c2                                      # 28
    outw = _ceil128(4 * wo)                           # 128
    rpad = x1w - 2 * half1                            # zero lanes of x1 (64 rows)
    zwo = jnp.zeros((half1, wo), f32)

    def rstk(top, bot):                               # (x1w, wo) column block
        return jnp.concatenate([top, bot, jnp.zeros((rpad, wo), f32)], axis=0)

    def zcol(w):
        return jnp.zeros((x1w, w), f32)

    B2 = jnp.concatenate(
        [rstk(M2[1], zwo),                    # p=0 main: ri=0/kh=1
         rstk(M2[2], M2[0]),                  # p=1:      ri=0/kh=2 + ri=1/kh=0
         rstk(M2[3], M2[1]),                  # p=2:      ri=0/kh=3 + ri=1/kh=1
         rstk(zwo, M2[2]),                    # p=3 main: ri=1/kh=2
         zcol(outw - 4 * wo),                 # main block lane pad
         rstk(zwo, M2[3]), zcol(outw - wo),   # shift-dn block: ri=1/kh=3 -> p=0
         zcol(3 * wo), rstk(M2[0], zwo),      # shift-up block: ri=0/kh=0 -> p=3
         zcol(outw - 4 * wo)],
        axis=1)                                       # (x1w, 3*outw)
    bias2 = jnp.concatenate(
        [jnp.tile(params["layer2"]["b"], 4 * h2),
         jnp.zeros((outw - 4 * wo,), f32)]).reshape(1, outw)

    kernel = functools.partial(_decoder2_kernel, n_batch=n, h0=h0,
                               x1w=x1w, outw=outw)
    vmem = pl.BlockSpec(memory_space=pltpu.MemorySpace.VMEM)

    flops = 2 * n * h0 * (h0 * latent * h0 * c0
                          + h0 * c0 * 3 * x1w
                          + x1w * 3 * outw)
    bytes_accessed = 4 * (z_exp.size + w0m.size + pbn.size + B1.size + B2.size
                          + n * h0 * outw)

    out = pl.pallas_call(
        kernel,
        out_shape=jax.ShapeDtypeStruct((n * h0, outw), f32),
        in_specs=[vmem] * 10,
        out_specs=vmem,
        cost_estimate=pl.CostEstimate(flops=flops, transcendentals=h0 * c0,
                                      bytes_accessed=bytes_accessed),
    )(z_exp, w0m, b0_t, g0_t, be0_t, pbn, B1, bias1, B2, bias2)

    # out[n*h0 + q, p*28 + ow] = image[n, 0, 4q + p, ow]; lanes [112:128) are pad.
    img = out[:, :4 * wo].reshape(n, 4 * h0, h2, c2)                 # NHWC rows in order
    return jnp.transpose(img, (0, 3, 1, 2))                          # NCHW


# ----------------------------------------------------------------------------
# Parameters (deterministic synthetic init; shapes match Decoder2.__init__)
# ----------------------------------------------------------------------------
def init_decoder2_params(key, latent_dim=2):
    specs = [("fc", latent_dim, 32, 7), ("layer1", 32, 16, 4), ("layer2", 16, 1, 4)]
    params = {}
    for name, ci, co, k in specs:
        key, k1, k2 = jax.random.split(key, 3)
        fan_in = float(np.sqrt(ci * k * k))
        params[name] = dict(
            w=jax.random.normal(k1, (ci, co, k, k), jnp.float32) / fan_in,
            b=jax.random.normal(k2, (co,), jnp.float32) * 0.1,
            gamma=jnp.ones((co,), jnp.float32),   # BN affine params (used by "fc")
            beta=jnp.zeros((co,), jnp.float32),
        )
    return params


# ----------------------------------------------------------------------------
# Pure-JAX reference (correctness check only)
# ----------------------------------------------------------------------------
def _ref_deconv(x_nhwc, w, b, *, stride, pad):
    cout, K = w.shape[1], w.shape[2]
    w_conv = jnp.transpose(w[:, :, ::-1, ::-1], (2, 3, 0, 1))        # HWIO
    pe = K - 1 - pad
    y = jax.lax.conv_general_dilated(
        x_nhwc, w_conv, window_strides=(1, 1),
        padding=[(pe, pe), (pe, pe)], lhs_dilation=(stride, stride),
        dimension_numbers=("NHWC", "HWIO", "NHWC"),
        precision=jax.lax.Precision.HIGHEST)
    return y + b.reshape(1, 1, 1, cout)


def decoder2_reference(params, z):
    n, latent = z.shape
    x = z.reshape(n, 1, 1, latent)
    # fc: ConvTranspose2d + BatchNorm2d (training-mode batch stats), no activation
    x = _ref_deconv(x, params["fc"]["w"], params["fc"]["b"], stride=1, pad=0)
    mean = jnp.mean(x, axis=(0, 1, 2), keepdims=True)
    var = jnp.mean(jnp.square(x - mean), axis=(0, 1, 2), keepdims=True)
    x = (x - mean) * jax.lax.rsqrt(var + 1e-5)
    x = (x * params["fc"]["gamma"].reshape(1, 1, 1, -1)
         + params["fc"]["beta"].reshape(1, 1, 1, -1))
    x = jnp.maximum(_ref_deconv(x, params["layer1"]["w"], params["layer1"]["b"],
                                stride=2, pad=1), 0.0)
    x = jnp.maximum(_ref_deconv(x, params["layer2"]["w"], params["layer2"]["b"],
                                stride=2, pad=1), 0.0)
    return jnp.transpose(x, (0, 3, 1, 2))


# ----------------------------------------------------------------------------
if __name__ == "__main__":
    key = jax.random.PRNGKey(0)
    k_params, k_z = jax.random.split(key)

    latent_dim, batch = 2, 2
    params = init_decoder2_params(k_params, latent_dim=latent_dim)
    z = jax.random.normal(k_z, (batch, latent_dim), jnp.float32)

    out = jax.block_until_ready(jax.jit(decoder2_forward)(params, z))
    assert out.shape == (batch, 1, 28, 28), out.shape
    assert out.dtype == jnp.float32

    ref = jax.block_until_ready(decoder2_reference(params, z))
    err = float(jnp.max(jnp.abs(out - ref)))
    # All-f32 pipeline; tolerance leaves headroom for MXU f32 pass decomposition.
    assert jnp.allclose(out, ref, atol=1e-3, rtol=1e-3), f"max abs err {err}"

    print("KERNEL_OK")
</pallas_src>

<mosaic_0001>
module attributes {stable_mosaic.version = 11 : i64} {
  func.func @_decoder2_kernel(%arg0: memref<14x14xf32, #tpu.memory_space<vmem>>, %arg1: memref<14x224xf32, #tpu.memory_space<vmem>>, %arg2: memref<1x224xf32, #tpu.memory_space<vmem>>, %arg3: memref<1x224xf32, #tpu.memory_space<vmem>>, %arg4: memref<1x224xf32, #tpu.memory_space<vmem>>, %arg5: memref<224x224xf32, #tpu.memory_space<vmem>>, %arg6: memref<224x1536xf32, #tpu.memory_space<vmem>>, %arg7: memref<1x512xf32, #tpu.memory_space<vmem>>, %arg8: memref<512x384xf32, #tpu.memory_space<vmem>>, %arg9: memref<1x128xf32, #tpu.memory_space<vmem>>, %arg10: memref<14x128xf32, #tpu.memory_space<vmem>>) attributes {dimension_semantics = [], scalar_prefetch = 0 : i64, scratch_operands = 0 : i64, tpu.core_type = #tpu.core_type<tc>} {
    %0 = tpu.iota {dimensions = array<i32: 0>} : vector<14x1xi32>
    %c7_i32 = arith.constant 7 : i32
    %c0_i32 = arith.constant 0 : i32
    %1 = arith.cmpi eq, %c7_i32, %c0_i32 : i32
    %c1_i32 = arith.constant 1 : i32
    %2 = arith.select %1, %c1_i32, %c7_i32 : i32
    %3 = vector.broadcast %2 : i32 to vector<14x1xi32>
    %4 = arith.remsi %0, %3 : vector<14x1xi32>
    %c0_i32_0 = arith.constant 0 : i32
    %5 = vector.broadcast %c0_i32_0 : i32 to vector<14x1xi32>
    %6 = arith.cmpi ne, %4, %5 : vector<14x1xi32>
    %c0_i32_1 = arith.constant 0 : i32
    %7 = vector.broadcast %c0_i32_1 : i32 to vector<14x1xi32>
    %8 = arith.cmpi slt, %4, %7 : vector<14x1xi32>
    %c0_i32_2 = arith.constant 0 : i32
    %9 = arith.cmpi slt, %2, %c0_i32_2 : i32
    %10 = vector.broadcast %9 : i1 to vector<14x1xi1>
    %11 = vector.broadcast %10 : vector<14x1xi1> to vector<14x1xi1>
    %12 = arith.xori %8, %11 : vector<14x1xi1>
    %13 = arith.andi %12, %6 : vector<14x1xi1>
    %14 = vector.broadcast %2 : i32 to vector<14x1xi32>
    %15 = arith.addi %4, %14 : vector<14x1xi32>
    %16 = arith.select %13, %15, %4 : vector<14x1xi1>, vector<14x1xi32>
    %c0_i32_3 = arith.constant 0 : i32
    %17 = vector.broadcast %c0_i32_3 : i32 to vector<14x1xi32>
    %18 = arith.cmpi ne, %16, %17 : vector<14x1xi32>
    %19 = arith.extui %18 : vector<14x1xi1> to vector<14x1xi32>
    %20 = arith.sitofp %19 : vector<14x1xi32> to vector<14x1xf32>
    %c6_i32 = arith.constant 6 : i32
    %21 = vector.broadcast %c6_i32 : i32 to vector<14x1xi32>
    %22 = arith.cmpi ne, %16, %21 : vector<14x1xi32>
    %23 = arith.extui %22 : vector<14x1xi1> to vector<14x1xi32>
    %24 = arith.sitofp %23 : vector<14x1xi32> to vector<14x1xf32>
    %c0 = arith.constant 0 : index
    %c0_4 = arith.constant 0 : index
    %25 = vector.load %arg0[%c0, %c0_4] : memref<14x14xf32, #tpu.memory_space<vmem>>, vector<14x14xf32>
    %c0_5 = arith.constant 0 : index
    %c0_6 = arith.constant 0 : index
    %26 = vector.load %arg1[%c0_5, %c0_6] : memref<14x224xf32, #tpu.memory_space<vmem>>, vector<14x224xf32>
    %cst = arith.constant dense<0.000000e+00> : vector<14x224xf32>
    %27 = tpu.matmul %25, %26, %cst {dimension_numbers = #tpu.dot_dimension_numbers<[1], [0], [0], [1], [0, 0, 1, 1], [], []>} : vector<14x14xf32>, vector<14x224xf32>, vector<14x224xf32> -> vector<14x224xf32>
    %c0_7 = arith.constant 0 : index
    %c0_8 = arith.constant 0 : index
    %28 = vector.load %arg2[%c0_7, %c0_8] : memref<1x224xf32, #tpu.memory_space<vmem>>, vector<1x224xf32>
    %29 = vector.broadcast %28 : vector<1x224xf32> to vector<14x224xf32>
    %30 = arith.addf %27, %29 : vector<14x224xf32>
    %cst_9 = arith.constant dense<0.000000e+00> : vector<224xf32>
    %31 = vector.multi_reduction <add>, %30, %cst_9 [0] : vector<14x224xf32> to vector<224xf32>
    %32 = vector.shape_cast %31 : vector<224xf32> to vector<1x224xf32>
    %33 = arith.mulf %30, %30 : vector<14x224xf32>
    %cst_10 = arith.constant dense<0.000000e+00> : vector<224xf32>
    %34 = vector.multi_reduction <add>, %33, %cst_10 [0] : vector<14x224xf32> to vector<224xf32>
    %35 = vector.shape_cast %34 : vector<224xf32> to vector<1x224xf32>
    %36 = tpu.concatenate %32, %35 in 0 : vector<1x224xf32>, vector<1x224xf32> -> vector<2x224xf32>
    %c0_11 = arith.constant 0 : index
    %c0_12 = arith.constant 0 : index
    %37 = vector.load %arg5[%c0_11, %c0_12] : memref<224x224xf32, #tpu.memory_space<vmem>>, vector<224x224xf32>
    %cst_13 = arith.constant dense<0.000000e+00> : vector<2x224xf32>
    %38 = tpu.matmul %36, %37, %cst_13 {dimension_numbers = #tpu.dot_dimension_numbers<[1], [0], [0], [1], [0, 0, 1, 1], [], []>} : vector<2x224xf32>, vector<224x224xf32>, vector<2x224xf32> -> vector<2x224xf32>
    %cst_14 = arith.constant 0.0102040814 : f32
    %39 = vector.broadcast %cst_14 : f32 to vector<2x224xf32>
    %40 = arith.mulf %38, %39 : vector<2x224xf32>
    %41 = vector.extract_strided_slice %40 {offsets = [0, 0], sizes = [1, 224], strides = [1, 1]} : vector<2x224xf32> to vector<1x224xf32>
    %42 = vector.extract_strided_slice %40 {offsets = [1, 0], sizes = [1, 224], strides = [1, 1]} : vector<2x224xf32> to vector<1x224xf32>
    %43 = arith.mulf %41, %41 : vector<1x224xf32>
    %44 = arith.subf %42, %43 : vector<1x224xf32>
    %cst_15 = arith.constant 0.000000e+00 : f32
    %45 = vector.broadcast %cst_15 : f32 to vector<1x224xf32>
    %46 = arith.maximumf %44, %45 : vector<1x224xf32>
    %47 = vector.broadcast %41 : vector<1x224xf32> to vector<14x224xf32>
    %48 = arith.subf %30, %47 : vector<14x224xf32>
    %cst_16 = arith.constant 9.99999974E-6 : f32
    %49 = vector.broadcast %cst_16 : f32 to vector<1x224xf32>
    %50 = arith.addf %46, %49 : vector<1x224xf32>
    %51 = math.rsqrt %50 : vector<1x224xf32>
    %52 = vector.broadcast %51 : vector<1x224xf32> to vector<14x224xf32>
    %53 = arith.mulf %48, %52 : vector<14x224xf32>
    %c0_17 = arith.constant 0 : index
    %c0_18 = arith.constant 0 : index
    %54 = vector.load %arg3[%c0_17, %c0_18] : memref<1x224xf32, #tpu.memory_space<vmem>>, vector<1x224xf32>
    %55 = vector.broadcast %54 : vector<1x224xf32> to vector<14x224xf32>
    %56 = arith.mulf %53, %55 : vector<14x224xf32>
    %c0_19 = arith.constant 0 : index
    %c0_20 = arith.constant 0 : index
    %57 = vector.load %arg4[%c0_19, %c0_20] : memref<1x224xf32, #tpu.memory_space<vmem>>, vector<1x224xf32>
    %58 = vector.broadcast %57 : vector<1x224xf32> to vector<14x224xf32>
    %59 = arith.addf %56, %58 : vector<14x224xf32>
    %c0_21 = arith.constant 0 : index
    %c0_22 = arith.constant 0 : index
    %60 = vector.load %arg6[%c0_21, %c0_22] : memref<224x1536xf32, #tpu.memory_space<vmem>>, vector<224x1536xf32>
    %cst_23 = arith.constant dense<0.000000e+00> : vector<14x1536xf32>
    %61 = tpu.matmul %59, %60, %cst_23 {dimension_numbers = #tpu.dot_dimension_numbers<[1], [0], [0], [1], [0, 0, 1, 1], [], []>} : vector<14x224xf32>, vector<224x1536xf32>, vector<14x1536xf32> -> vector<14x1536xf32>
    %62 = vector.extract_strided_slice %61 {offsets = [0, 0], sizes = [14, 512], strides = [1, 1]} : vector<14x1536xf32> to vector<14x512xf32>
    %63 = vector.extract_strided_slice %61 {offsets = [0, 512], sizes = [14, 512], strides = [1, 1]} : vector<14x1536xf32> to vector<14x512xf32>
    %cst_24 = arith.constant 0.000000e+00 : f32
    %64 = vector.broadcast %cst_24 : f32 to vector<1x512xf32>
    %65 = vector.extract_strided_slice %63 {offsets = [0, 0], sizes = [13, 512], strides = [1, 1]} : vector<14x512xf32> to vector<13x512xf32>
    %66 = tpu.concatenate %64, %65 in 0 : vector<1x512xf32>, vector<13x512xf32> -> vector<14x512xf32>
    %67 = vector.broadcast %20 : vector<14x1xf32> to vector<14x512xf32>
    %68 = arith.mulf %66, %67 : vector<14x512xf32>
    %69 = arith.addf %62, %68 : vector<14x512xf32>
    %70 = vector.extract_strided_slice %61 {offsets = [0, 1024], sizes = [14, 512], strides = [1, 1]} : vector<14x1536xf32> to vector<14x512xf32>
    %71 = vector.extract_strided_slice %70 {offsets = [1, 0], sizes = [13, 512], strides = [1, 1]} : vector<14x512xf32> to vector<13x512xf32>
    %cst_25 = arith.constant 0.000000e+00 : f32
    %72 = vector.broadcast %cst_25 : f32 to vector<1x512xf32>
    %73 = tpu.concatenate %71, %72 in 0 : vector<13x512xf32>, vector<1x512xf32> -> vector<14x512xf32>
    %74 = vector.broadcast %24 : vector<14x1xf32> to vector<14x512xf32>
    %75 = arith.mulf %73, %74 : vector<14x512xf32>
    %76 = arith.addf %69, %75 : vector<14x512xf32>
    %c0_26 = arith.constant 0 : index
    %c0_27 = arith.constant 0 : index
    %77 = vector.load %arg7[%c0_26, %c0_27] : memref<1x512xf32, #tpu.memory_space<vmem>>, vector<1x512xf32>
    %78 = vector.broadcast %77 : vector<1x512xf32> to vector<14x512xf32>
    %79 = arith.addf %76, %78 : vector<14x512xf32>
    %cst_28 = arith.constant 0.000000e+00 : f32
    %80 = vector.broadcast %cst_28 : f32 to vector<14x512xf32>
    %81 = arith.maximumf %79, %80 : vector<14x512xf32>
    %c0_29 = arith.constant 0 : index
    %c0_30 = arith.constant 0 : index
    %82 = vector.load %arg8[%c0_29, %c0_30] : memref<512x384xf32, #tpu.memory_space<vmem>>, vector<512x384xf32>
    %cst_31 = arith.constant dense<0.000000e+00> : vector<14x384xf32>
    %83 = tpu.matmul %81, %82, %cst_31 {dimension_numbers = #tpu.dot_dimension_numbers<[1], [0], [0], [1], [0, 0, 1, 1], [], []>} : vector<14x512xf32>, vector<512x384xf32>, vector<14x384xf32> -> vector<14x384xf32>
    %84 = vector.extract_strided_slice %83 {offsets = [0, 0], sizes = [14, 128], strides = [1, 1]} : vector<14x384xf32> to vector<14x128xf32>
    %85 = vector.extract_strided_slice %83 {offsets = [0, 128], sizes = [14, 128], strides = [1, 1]} : vector<14x384xf32> to vector<14x128xf32>
    %cst_32 = arith.constant 0.000000e+00 : f32
    %86 = vector.broadcast %cst_32 : f32 to vector<1x128xf32>
    %87 = vector.extract_strided_slice %85 {offsets = [0, 0], sizes = [13, 128], strides = [1, 1]} : vector<14x128xf32> to vector<13x128xf32>
    %88 = tpu.concatenate %86, %87 in 0 : vector<1x128xf32>, vector<13x128xf32> -> vector<14x128xf32>
    %89 = vector.broadcast %20 : vector<14x1xf32> to vector<14x128xf32>
    %90 = arith.mulf %88, %89 : vector<14x128xf32>
    %91 = arith.addf %84, %90 : vector<14x128xf32>
    %92 = vector.extract_strided_slice %83 {offsets = [0, 256], sizes = [14, 128], strides = [1, 1]} : vector<14x384xf32> to vector<14x128xf32>
    %93 = vector.extract_strided_slice %92 {offsets = [1, 0], sizes = [13, 128], strides = [1, 1]} : vector<14x128xf32> to vector<13x128xf32>
    %cst_33 = arith.constant 0.000000e+00 : f32
    %94 = vector.broadcast %cst_33 : f32 to vector<1x128xf32>
    %95 = tpu.concatenate %93, %94 in 0 : vector<13x128xf32>, vector<1x128xf32> -> vector<14x128xf32>
    %96 = vector.broadcast %24 : vector<14x1xf32> to vector<14x128xf32>
    %97 = arith.mulf %95, %96 : vector<14x128xf32>
    %98 = arith.addf %91, %97 : vector<14x128xf32>
    %c0_34 = arith.constant 0 : index
    %c0_35 = arith.constant 0 : index
    %99 = vector.load %arg9[%c0_34, %c0_35] : memref<1x128xf32, #tpu.memory_space<vmem>>, vector<1x128xf32>
    %100 = vector.broadcast %99 : vector<1x128xf32> to vector<14x128xf32>
    %101 = arith.addf %98, %100 : vector<14x128xf32>
    %cst_36 = arith.constant 0.000000e+00 : f32
    %102 = vector.broadcast %cst_36 : f32 to vector<14x128xf32>
    %103 = arith.maximumf %101, %102 : vector<14x128xf32>
    %c0_37 = arith.constant 0 : index
    %c0_38 = arith.constant 0 : index
    %104 = vector.load %arg10[%c0_37, %c0_38] : memref<14x128xf32, #tpu.memory_space<vmem>>, vector<14x128xf32>
    tpu.vector_store %arg10[%c0_37, %c0_38], %103 {strides = array<i32>} : memref<14x128xf32, #tpu.memory_space<vmem>>, vector<14x128xf32>,
    return
  }
}

</mosaic_0001>

<llo_original>
// kernel: tile.43
$region0: #{tile.43}
  #allocation0 [shape = 's32[1]{0}', space=sflag, size = 0x4, scoped, tag = 'scoped memory for tile.43']
  %s0 = inlined_call_operand.vmem [shape: f32[16], index: 0, kind: input, shape index: {}]
  %s1 = inlined_call_operand.vmem [shape: f32[28,16], index: 1, kind: output, shape index: {}]
  // Predicated region
  $region2: #{tile.43} parent=0 // pred_check
    _
  $region3: #{tile.43} parent=0 // pred_check_branch
    %3 = sbr.rel (0) target = $region5
  $region4: #{tile.43} parent=0 // pred_region
    _
  $region5: #{tile.43} parent=0 // pred_fallthru
    _
  %v4 = vld [vmem:[%s0] ss:$0 sm:$0xff]
  %5 = vst [vmem:[%s1] sm:$0xff] %v4
  %s6 = scalar_lea.vmem %s1, 8
  %7 = vst [vmem:[%s6] sm:$0xff] %v4
  %s8 = scalar_lea.vmem %s1, 16
  %9 = vst [vmem:[%s8] sm:$0xff] %v4
  %s10 = scalar_lea.vmem %s1, 24
  %11 = vst [vmem:[%s10] sm:$0xff] %v4

// kernel: tile.44
$region0: #{tile.44}
  %s0 = inlined_call_operand.vmem [shape: f32[28,16], index: 0, kind: input, shape index: {}]
  %s1 = inlined_call_operand.vmem [shape: f32[448], index: 1, kind: output, shape index: {}]
  $region1: #{tile.44} parent=0
    #allocation0 [shape = 'u8[4096]{0}', space=vmem, size = 0x1000, scoped, tag = 'scoped mem for output reshape']
    %v2 = vld [vmem:[%s0] ss:$8 sm:$0xf]
    %vm3 = vcmask 130048
    %4 = vst.msk [vmem:[#allocation0] sm:$0xf] %vm3, %v2
    %s5 = scalar_lea.vmem %s0, 7
    %v6 = vld [vmem:[%s5] ss:$8 sm:$0x7]
    %7 = vrot.lane.b32.xlu0 %v6, 112
    %v8 = vpop.permute.xlu0 %7
    %vm9 = vcmask 1048448
    %10 = vst.msk [vmem:[#allocation0] sm:$0x7] %vm9, %v8
    %s11 = scalar_lea.vmem %s0, 6
    %v12 = vld [vmem:[%s11] ss:$8 sm:$0x7]
    %13 = vrot.lane.b32.xlu0 %v12, 96
    %v14 = vpop.permute.xlu0 %13
    %vm15 = vcmask 917248
    %16 = vst.msk [vmem:[#allocation0] sm:$0x7] %vm15, %v14
    %s17 = scalar_lea.vmem %s0, 5
    %v18 = vld [vmem:[%s17] ss:$8 sm:$0x7]
    %19 = vrot.lane.b32.xlu0 %v18, 80
    %v20 = vpop.permute.xlu0 %19
    %vm21 = vcmask 786048
    %22 = vst.msk [vmem:[#allocation0] sm:$0x7] %vm21, %v20
    %s23 = scalar_lea.vmem %s0, 4
    %v24 = vld [vmem:[%s23] ss:$8 sm:$0x7]
    %25 = vrot.lane.b32.xlu0 %v24, 64
    %v26 = vpop.permute.xlu0 %25
    %vm27 = vcmask 654848
    %28 = vst.msk [vmem:[#allocation0] sm:$0x7] %vm27, %v26
    %s29 = scalar_lea.vmem %s0, 3
    %v30 = vld [vmem:[%s29] ss:$8 sm:$0xf]
    %31 = vrot.lane.b32.xlu0 %v30, 48
    %v32 = vpop.permute.xlu0 %31
    %vm33 = vcmask 523648
    %34 = vst.msk [vmem:[#allocation0] sm:$0xf] %vm33, %v32
    %s35 = scalar_lea.vmem %s0, 2
    %v36 = vld [vmem:[%s35] ss:$8 sm:$0xf]
    %37 = vrot.lane.b32.xlu0 %v36, 32
    %v38 = vpop.permute.xlu0 %37
    %vm39 = vcmask 392448
    %40 = vst.msk [vmem:[#allocation0] sm:$0xf] %vm39, %v38
    %s41 = scalar_lea.vmem %s0, 1
    %v42 = vld [vmem:[%s41] ss:$8 sm:$0xf]
    %43 = vrot.lane.b32.xlu0 %v42, 16
    %v44 = vpop.permute.xlu0 %43
    %vm45 = vcmask 261248
    %46 = vst.msk [vmem:[#allocation0] sm:$0xf] %vm45, %v44
    %s48 = ssub.s32 16, 1
    %v49 = vld [vmem:[#allocation0] sm:%s48]
    %s51 = ssub.s32 16, 1
    %52 = vst [vmem:[%s1] sm:%s51] %v49

// kernel: tile.28
$region0: #{tile.28}
  #allocation0 [shape = 's32[1]{0}', space=sflag, size = 0x4, scoped, tag = 'scoped memory for tile.28']
  %s0 = inlined_call_operand.vmem [shape: f32[32], index: 0, kind: input, shape index: {}]
  %s1 = inlined_call_operand.vmem [shape: f32[7,32], index: 1, kind: output, shape index: {}]
  // Predicated region
  $region2: #{tile.28} parent=0 // pred_check
    _
  $region3: #{tile.28} parent=0 // pred_check_branch
    %3 = sbr.rel (0) target = $region5
  $region4: #{tile.28} parent=0 // pred_region
    _
  $region5: #{tile.28} parent=0 // pred_fallthru
    _
  %v4 = vld [vmem:[%s0] ss:$0 sm:$0xff]
  %5 = vst [vmem:[%s1] sm:$0xff] %v4

// kernel: tile.29
$region0: #{tile.29}
  %s0 = inlined_call_operand.vmem [shape: f32[7,32], index: 0, kind: input, shape index: {}]
  %s1 = inlined_call_operand.vmem [shape: f32[1,224], index: 1, kind: output, shape index: {}]
  $region1: #{tile.29} parent=0
    #allocation0 [shape = 'u8[8192]{0}', space=vmem, size = 0x2000, scoped, tag = 'scoped mem for output reshape']
    %s2 = smov 3
    %v3 = vld [vmem:[%s0] ss:$4 sm:%s2]
    %vm4 = vcmask 261120
    %5 = vst.msk [vmem:[#allocation0] ss:$8 sm:$0x3] %vm4, %v3
    %s6 = scalar_lea.vmem %s0, 3
    %v7 = vld [vmem:[%s6] sm:$0x1]
    %8 = vrot.lane.b32.xlu0 %v7, 96
    %v9 = vpop.permute.xlu0 %8
    %vm10 = vcmask 1048320
    %11 = vst.msk [vmem:[#allocation0] sm:$0x1] %vm10, %v9
    %s12 = scalar_lea.vmem %s0, 2
    %s13 = smov 3
    %v14 = vld [vmem:[%s12] ss:$4 sm:%s13]
    %15 = vrot.lane.b32.xlu0 %v14, 64
    %v16 = vpop.permute.xlu0 %15
    %vm17 = vcmask 785920
    %18 = vst.msk [vmem:[#allocation0] ss:$8 sm:$0x3] %vm17, %v16
    %s19 = scalar_lea.vmem %s0, 1
    %s20 = smov 3
    %v21 = vld [vmem:[%s19] ss:$4 sm:%s20]
    %22 = vrot.lane.b32.xlu0 %v21, 32
    %v23 = vpop.permute.xlu0 %22
    %vm24 = vcmask 523520
    %25 = vst.msk [vmem:[#allocation0] ss:$8 sm:$0x3] %vm24, %v23
    %s27 = ssub.s32 2, 1
    %v28 = vld [vmem:[#allocation0] sm:%s27]
    %s30 = ssub.s32 2, 1
    %31 = vst [vmem:[%s1] sm:%s30] %v28
    %s32 = scalar_lea.vmem [#allocation0], 8
    %v33 = vld [vmem:[%s32] sm:%s27]
    %s35 = ssub.s32 2, 1
    %s36 = scalar_lea.vmem %s1, 1
    %37 = vst [vmem:[%s36] sm:%s35] %v33

// kernel: decoder2_forward.1
$region0: #{decoder2_forward.1}
  #allocation0 [shape = 'u32[]', space=smem, size = 0x4, offset = 0x4, fixed_abs, tag = 'smem constant byte address 0x4 - core index']
  #allocation1 [shape = 'u32[72,128]{1,0:T(1,128)}', space=vmem, size = 0x9000, scoped, tag = 'internal scratch']
  %s0 = inlined_call_operand.vmem [shape: f32[14,14], index: 0, kind: input, shape index: {}]
  %s1 = inlined_call_operand.vmem [shape: f32[14,224], index: 1, kind: input, shape index: {}]
  %s2 = inlined_call_operand.vmem [shape: f32[1,224], index: 2, kind: input, shape index: {}]
  %s3 = inlined_call_operand.vmem [shape: f32[1,224], index: 3, kind: input, shape index: {}]
  %s4 = inlined_call_operand.vmem [shape: f32[1,224], index: 4, kind: input, shape index: {}]
  %s5 = inlined_call_operand.vmem [shape: f32[224,224], index: 5, kind: input, shape index: {}]
  %s6 = inlined_call_operand.vmem [shape: f32[224,1536], index: 6, kind: input, shape index: {}]
  %s7 = inlined_call_operand.vmem [shape: f32[1,512], index: 7, kind: input, shape index: {}]
  %s8 = inlined_call_operand.vmem [shape: f32[512,384], index: 8, kind: input, shape index: {}]
  %s9 = inlined_call_operand.vmem [shape: f32[1,128], index: 9, kind: input, shape index: {}]
  %s10 = inlined_call_operand.vmem [shape: f32[14,128], index: 10, kind: output, shape index: {}]
  %s11 = sld [smem:[#allocation0]]
  $region50: #{decoder2_forward.1} parent=0
    _
  %s13 = ssub.s32 1, %s11
  %s14 = scalar_select 0, %s13, %s11
  // Predicated region
  $region2: #{decoder2_forward.1} parent=0 // pred_check
    _
  $region3: #{decoder2_forward.1} parent=0 // pred_check_branch
    %16 = sbr.rel (0) target = $region5
  $region4: #{decoder2_forward.1} parent=0 // pred_region
    _
  $region5: #{decoder2_forward.1} parent=0 // pred_fallthru
    _
  // Predicated region
  $region6: #{decoder2_forward.1} parent=0 // pred_check
    _
  $region7: #{decoder2_forward.1} parent=0 // pred_check_branch
    %18 = sbr.rel (0) target = $region9
  $region8: #{decoder2_forward.1} parent=0 // pred_region
    _
  $region9: #{decoder2_forward.1} parent=0 // pred_fallthru
    _
  // Predicated region
  $region10: #{decoder2_forward.1} parent=0 // pred_check
    _
  $region11: #{decoder2_forward.1} parent=0 // pred_check_branch
    %20 = sbr.rel (0) target = $region13
  $region12: #{decoder2_forward.1} parent=0 // pred_region
    _
  $region13: #{decoder2_forward.1} parent=0 // pred_fallthru
    _
  // Predicated region
  $region14: #{decoder2_forward.1} parent=0 // pred_check
    _
  $region15: #{decoder2_forward.1} parent=0 // pred_check_branch
    %22 = sbr.rel (0) target = $region17
  $region16: #{decoder2_forward.1} parent=0 // pred_region
    _
  $region17: #{decoder2_forward.1} parent=0 // pred_fallthru
    _
  // Predicated region
  $region18: #{decoder2_forward.1} parent=0 // pred_check
    _
  $region19: #{decoder2_forward.1} parent=0 // pred_check_branch
    %24 = sbr.rel (0) target = $region21
  $region20: #{decoder2_forward.1} parent=0 // pred_region
    _
  $region21: #{decoder2_forward.1} parent=0 // pred_fallthru
    _
  // Predicated region
  $region22: #{decoder2_forward.1} parent=0 // pred_check
    _
  $region23: #{decoder2_forward.1} parent=0 // pred_check_branch
    %26 = sbr.rel (0) target = $region25
  $region24: #{decoder2_forward.1} parent=0 // pred_region
    _
  $region25: #{decoder2_forward.1} parent=0 // pred_fallthru
    _
  // Predicated region
  $region26: #{decoder2_forward.1} parent=0 // pred_check
    _
  $region27: #{decoder2_forward.1} parent=0 // pred_check_branch
    %28 = sbr.rel (0) target = $region29
  $region28: #{decoder2_forward.1} parent=0 // pred_region
    _
  $region29: #{decoder2_forward.1} parent=0 // pred_fallthru
    _
  // Predicated region
  $region30: #{decoder2_forward.1} parent=0 // pred_check
    _
  $region31: #{decoder2_forward.1} parent=0 // pred_check_branch
    %30 = sbr.rel (0) target = $region33
  $region32: #{decoder2_forward.1} parent=0 // pred_region
    _
  $region33: #{decoder2_forward.1} parent=0 // pred_fallthru
    _
  // Predicated region
  $region34: #{decoder2_forward.1} parent=0 // pred_check
    _
  $region35: #{decoder2_forward.1} parent=0 // pred_check_branch
    %32 = sbr.rel (0) target = $region37
  $region36: #{decoder2_forward.1} parent=0 // pred_region
    _
  $region37: #{decoder2_forward.1} parent=0 // pred_fallthru
    _
  // Predicated region
  $region38: #{decoder2_forward.1} parent=0 // pred_check
    _
  $region39: #{decoder2_forward.1} parent=0 // pred_check_branch
    %34 = sbr.rel (0) target = $region41
  $region40: #{decoder2_forward.1} parent=0 // pred_region
    _
  $region41: #{decoder2_forward.1} parent=0 // pred_fallthru
    _
  %v35 = vlaneseq
  %v36 = vshrl.u32 %v35, 7
  %v37 = vadd.s32 %v36, 8
  %vm38 = vcmp.lt.s32.totalorder %v36, 0
  %v39 = vsub.s32 0, %v36
  %v40 = vsel %vm38, %v39, %v36
  %v41 = vand.u32 %v40, 65535
  %v42 = vshrl.u32 %v40, 16
  %v44 = vmul.u32 %v41, 9362
  %v45 = vmul.u32 %v41, 37449
  %v46 = vmul.u32 %v42, 9362
  %v47 = vmul.u32 %v42, 37449
  %v48 = vshll.u32 %v45, 16
  %v49 = vshrl.u32 %v45, 16
  %v50 = vshll.u32 %v46, 16
  %v51 = vshrl.u32 %v46, 16
  %vm52 = vc.u32 %v44, %v48
  %v53 = vsel %vm52, 1, 0
  %v54 = vadd.s32 %v44, %v48
  %v55 = vadd.s32 %v47, %v53
  %vm56 = vc.u32 %v54, %v50
  %v57 = vsel %vm56, 1, 0
  %v58 = vadd.s32 %v54, %v50
  %v59 = vadd.s32 %v55, %v57
  %v60 = vadd.s32 %v59, %v49
  %v61 = vadd.s32 %v60, %v51
  %vm62 = vc.u32 %v58, 2454267026
  %v63 = vsel %vm62, 1, 0
  %v64 = vadd.s32 %v61, %v63
  %v65 = vshrl.u32 %v64, 2
  %v66 = vmul.u32 %v65, 7
  %v67 = vsub.s32 %v40, %v66
  %v68 = vsub.s32 0, %v67
  %v69 = vsel %vm38, %v68, %v67
  %vm70 = vcmp.lt.s32.totalorder %v37, 0
  %v71 = vsub.s32 0, %v37
  %v72 = vsel %vm70, %v71, %v37
  %v73 = vand.u32 %v72, 65535
  %v74 = vshrl.u32 %v72, 16
  %v76 = vmul.u32 %v73, 9362
  %v77 = vmul.u32 %v73, 37449
  %v78 = vmul.u32 %v74, 9362
  %v79 = vmul.u32 %v74, 37449
  %v80 = vshll.u32 %v77, 16
  %v81 = vshrl.u32 %v77, 16
  %v82 = vshll.u32 %v78, 16
  %v83 = vshrl.u32 %v78, 16
  %vm84 = vc.u32 %v76, %v80
  %v85 = vsel %vm84, 1, 0
  %v86 = vadd.s32 %v76, %v80
  %v87 = vadd.s32 %v79, %v85
  %vm88 = vc.u32 %v86, %v82
  %v89 = vsel %vm88, 1, 0
  %v90 = vadd.s32 %v86, %v82
  %v91 = vadd.s32 %v87, %v89
  %v92 = vadd.s32 %v91, %v81
  %v93 = vadd.s32 %v92, %v83
  %vm94 = vc.u32 %v90, 2454267026
  %v95 = vsel %vm94, 1, 0
  %v96 = vadd.s32 %v93, %v95
  %v97 = vshrl.u32 %v96, 2
  %v98 = vmul.u32 %v97, 7
  %v99 = vsub.s32 %v72, %v98
  %v100 = vsub.s32 0, %v99
  %v101 = vsel %vm70, %v100, %v99
  %vm102 = vcmp.ne.s32.totalorder %v69, 0
  %vm103 = vcmp.ne.s32.totalorder %v101, 0
  %vm104 = vcmp.lt.s32.totalorder %v69, 0
  %vm105 = vcmp.lt.s32.totalorder %v101, 0
  %vm106 = vmand %vm104, %vm102
  %vm107 = vmand %vm105, %vm103
  %v108 = vadd.s32 %v69, 7
  %v109 = vadd.s32 %v101, 7
  %v110 = vsel %vm106, %v108, %v69
  %v111 = vsel %vm107, %v109, %v101
  %vm112 = vcmp.ne.s32.totalorder %v110, 0
  %vm113 = vcmp.ne.s32.totalorder %v111, 0
  %v114 = vsel %vm112, 1, 0
  %v115 = vsel %vm113, 1, 0
  %v116 = vcvt.s32.f32 %v114
  %v117 = vcvt.s32.f32 %v115
  %vm118 = vcmp.ne.s32.totalorder %v110, 6
  %vm119 = vcmp.ne.s32.totalorder %v111, 6
  %v120 = vsel %vm118, 1, 0
  %v121 = vsel %vm119, 1, 0
  %v122 = vcvt.s32.f32 %v120
  %v123 = vcvt.s32.f32 %v121
  %v124 = vld [vmem:[%s0] sm:$0xff]
  %v125 = vld [vmem:[%s0 + $0x8] sm:$0x3f]
  %v126 = vld [vmem:[%s1] sm:$0xff]
  %v127 = vld [vmem:[%s1 + $0x8] sm:$0xff]
  %v128 = vld [vmem:[%s1 + $0x10] sm:$0x3f]
  %v129 = vld [vmem:[%s1 + $0x18] sm:$0x3f]
  %v130 = vld [vmem:[%s2] sm:$0x3]
  %v132 = vperm.slane %v130, 0
  %v133 = vperm.slane %v130, 1
  %vm136 = vcmask 113664
  %v138 = vsel %vm136, %v124, 0
  %v141 = vsel %vm136, %v125, 0
  %vm143 = vcmask 1045504
  %v145 = vsel %vm143, %v128, 0
  %v148 = vsel %vm143, %v129, 0
  %150 = vmatpush.msra.mxu0 0.0
  %151 = vmatpush.msra.mxu0 0.0
  %152 = vmatpush.msra.mxu0 0.0
  %153 = vmatpush.msra.mxu0 0.0
  %154 = vmatpush.msra.mxu0 0.0
  %155 = vmatpush.msra.mxu0 0.0
  %156 = vmatpush.msra.mxu0 0.0
  %157 = vmatpush.msra.mxu0 0.0
  %158 = vmatpush.msra.mxu0 0.0
  %159 = vmatpush.msra.mxu0 0.0
  %160 = vmatpush.msra.mxu0 0.0
  %161 = vmatpush.msra.mxu0 0.0
  %162 = vmatpush.msra.mxu0 0.0
  %163 = vmatpush.msra.mxu0 0.0
  %164 = vmatpush.msra.mxu0 %v145
  %165 = vmatpush.msra.mxu0 %v126
  %166 = vmatmul.f32.gmra.mxu0 %v138
  %v167 = vpop.f32.mrf.mxu0
  %v168 = vadd.f32 %v132, %v167
  %169 = vmatmul.f32.gmra.mxu0 %v141
  %v170 = vpop.f32.mrf.mxu0
  %v171 = vadd.f32 %v132, %v170
  %172 = vdwg.mxu0
  %173 = vmatpush.msra.mxu0 0.0
  %174 = vmatpush.msra.mxu0 0.0
  %175 = vmatpush.msra.mxu0 0.0
  %176 = vmatpush.msra.mxu0 0.0
  %177 = vmatpush.msra.mxu0 0.0
  %178 = vmatpush.msra.mxu0 0.0
  %179 = vmatpush.msra.mxu0 0.0
  %180 = vmatpush.msra.mxu0 0.0
  %181 = vmatpush.msra.mxu0 0.0
  %182 = vmatpush.msra.mxu0 0.0
  %183 = vmatpush.msra.mxu0 0.0
  %184 = vmatpush.msra.mxu0 0.0
  %185 = vmatpush.msra.mxu0 0.0
  %186 = vmatpush.msra.mxu0 0.0
  %187 = vmatpush.msra.mxu0 %v148
  %188 = vmatpush.msra.mxu0 %v127
  %189 = vmatmul.f32.gmra.mxu0 %v138
  %v190 = vpop.f32.mrf.mxu0
  %v191 = vadd.f32 %v133, %v190
  %192 = vmatmul.f32.gmra.mxu0 %v141
  %v193 = vpop.f32.mrf.mxu0
  %v194 = vadd.f32 %v133, %v193
  %195 = vdwg.mxu0
  %v196 = vsel %vm143, %v171, 0.0
  %v197 = vadd.f32 %v168, %v196
  %v198 = vrot.slane %v197, 4
  %v199 = vadd.f32 %v197, %v198
  %v200 = vrot.slane %v199, 2
  %v201 = vadd.f32 %v199, %v200
  %v202 = vrot.slane %v201, 1
  %v203 = vadd.f32 %v201, %v202
  %vm204 = vcmask 785408
  %v205 = vsel %vm204, %v191, 0.0
  %vm206 = vcmask 783360
  %v207 = vsel %vm206, %v194, 0.0
  %v208 = vadd.f32 %v205, %v207
  %v209 = vrot.slane %v208, 4
  %v210 = vadd.f32 %v208, %v209
  %v211 = vrot.slane %v210, 2
  %v212 = vadd.f32 %v210, %v211
  %v213 = vrot.slane %v212, 1
  %v214 = vadd.f32 %v212, %v213
  %v215 = vmul.f32 %v168, %v168
  %v216 = vmul.f32 %v191, %v191
  %v217 = vmul.f32 %v171, %v171
  %v218 = vmul.f32 %v194, %v194
  %v219 = vsel %vm143, %v217, 0.0
  %v220 = vadd.f32 %v215, %v219
  %v221 = vrot.slane %v220, 4
  %v222 = vadd.f32 %v220, %v221
  %v223 = vrot.slane %v222, 2
  %v224 = vadd.f32 %v222, %v223
  %v225 = vrot.slane %v224, 1
  %v226 = vadd.f32 %v224, %v225
  %v227 = vsel %vm204, %v216, 0.0
  %v228 = vsel %vm206, %v218, 0.0
  %v229 = vadd.f32 %v227, %v228
  %v230 = vrot.slane %v229, 4
  %v231 = vadd.f32 %v229, %v230
  %v232 = vrot.slane %v231, 2
  %v233 = vadd.f32 %v231, %v232
  %v234 = vrot.slane %v233, 1
  %v235 = vadd.f32 %v233, %v234
  %vm236 = vcmask 1040384
  %v237 = vsel %vm236, %v203, %v226
  %v238 = vsel %vm236, %v214, %v235
  %v239 = vld [vmem:[%s5] sm:$0xff]
  %v240 = vld [vmem:[%s5 + $0x8] sm:$0xff]
  %v241 = vld [vmem:[%s5 + $0x10] sm:$0xff]
  %v242 = vld [vmem:[%s5 + $0x18] sm:$0xff]
  %v243 = vld [vmem:[%s5 + $0x20] sm:$0xff]
  %v244 = vld [vmem:[%s5 + $0x28] sm:$0xff]
  %v245 = vld [vmem:[%s5 + $0x30] sm:$0xff]
  %v246 = vld [vmem:[%s5 + $0x38] sm:$0xff]
  %v247 = vld [vmem:[%s5 + $0x40] sm:$0xff]
  %v248 = vld [vmem:[%s5 + $0x48] sm:$0xff]
  %v249 = vld [vmem:[%s5 + $0x50] sm:$0xff]
  %v250 = vld [vmem:[%s5 + $0x58] sm:$0xff]
  %v251 = vld [vmem:[%s5 + $0x60] sm:$0xff]
  %v252 = vld [vmem:[%s5 + $0x68] sm:$0xff]
  %v253 = vld [vmem:[%s5 + $0x70] sm:$0xff]
  %v254 = vld [vmem:[%s5 + $0x78] sm:$0xff]
  %v255 = vld [vmem:[%s5 + $0x80] sm:$0xff]
  %v256 = vld [vmem:[%s5 + $0x88] sm:$0xff]
  %v257 = vld [vmem:[%s5 + $0x90] sm:$0xff]
  %v258 = vld [vmem:[%s5 + $0x98] sm:$0xff]
  %v259 = vld [vmem:[%s5 + $0xa0] sm:$0xff]
  %v260 = vld [vmem:[%s5 + $0xa8] sm:$0xff]
  %v261 = vld [vmem:[%s5 + $0xb0] sm:$0xff]
  %v262 = vld [vmem:[%s5 + $0xb8] sm:$0xff]
  %v263 = vld [vmem:[%s5 + $0xc0] sm:$0xff]
  %v264 = vld [vmem:[%s5 + $0xc8] sm:$0xff]
  %v265 = vld [vmem:[%s5 + $0xd0] sm:$0xff]
  %v266 = vld [vmem:[%s5 + $0xd8] sm:$0xff]
  %v267 = vld [vmem:[%s5 + $0xe0] sm:$0xff]
  %v268 = vld [vmem:[%s5 + $0xe8] sm:$0xff]
  %v269 = vld [vmem:[%s5 + $0xf0] sm:$0xff]
  %v270 = vld [vmem:[%s5 + $0xf8] sm:$0xff]
  %v271 = vld [vmem:[%s5 + $0x100] sm:$0xff]
  %v272 = vld [vmem:[%s5 + $0x108] sm:$0xff]
  %v273 = vld [vmem:[%s5 + $0x110] sm:$0xff]
  %v274 = vld [vmem:[%s5 + $0x118] sm:$0xff]
  %v275 = vld [vmem:[%s5 + $0x120] sm:$0xff]
  %v276 = vld [vmem:[%s5 + $0x128] sm:$0xff]
  %v277 = vld [vmem:[%s5 + $0x130] sm:$0xff]
  %v278 = vld [vmem:[%s5 + $0x138] sm:$0xff]
  %v279 = vld [vmem:[%s5 + $0x140] sm:$0xff]
  %v280 = vld [vmem:[%s5 + $0x148] sm:$0xff]
  %v281 = vld [vmem:[%s5 + $0x150] sm:$0xff]
  %v282 = vld [vmem:[%s5 + $0x158] sm:$0xff]
  %v283 = vld [vmem:[%s5 + $0x160] sm:$0xff]
  %v284 = vld [vmem:[%s5 + $0x168] sm:$0xff]
  %v285 = vld [vmem:[%s5 + $0x170] sm:$0xff]
  %v286 = vld [vmem:[%s5 + $0x178] sm:$0xff]
  %v287 = vld [vmem:[%s5 + $0x180] sm:$0xff]
  %v288 = vld [vmem:[%s5 + $0x188] sm:$0xff]
  %v289 = vld [vmem:[%s5 + $0x190] sm:$0xff]
  %v290 = vld [vmem:[%s5 + $0x198] sm:$0xff]
  %v291 = vld [vmem:[%s5 + $0x1a0] sm:$0xff]
  %v292 = vld [vmem:[%s5 + $0x1a8] sm:$0xff]
  %v293 = vld [vmem:[%s5 + $0x1b0] sm:$0xff]
  %v294 = vld [vmem:[%s5 + $0x1b8] sm:$0xff]
  %v296 = vsel %vm204, %v238, 0
  %298 = vmatpush.msra.mxu0 %v269
  %299 = vmatpush.msra.mxu0 %v267
  %300 = vmatpush.msra.mxu0 %v265
  %301 = vmatpush.msra.mxu0 %v263
  %302 = vmatpush.msra.mxu0 %v261
  %303 = vmatpush.msra.mxu0 %v259
  %304 = vmatpush.msra.mxu0 %v257
  %305 = vmatpush.msra.mxu0 %v255
  %306 = vmatpush.msra.mxu0 %v253
  %307 = vmatpush.msra.mxu0 %v251
  %308 = vmatpush.msra.mxu0 %v249
  %309 = vmatpush.msra.mxu0 %v247
  %310 = vmatpush.msra.mxu0 %v245
  %311 = vmatpush.msra.mxu0 %v243
  %312 = vmatpush.msra.mxu0 %v241
  %313 = vmatpush.msra.mxu0 %v239
  %314 = vmatmul.f32.gmra.mxu0 %v237
  %v315 = vpop.f32.mrf.mxu0
  %v316 = vadd.f32 0.0, %v315
  %317 = vdwg.mxu0
  %318 = vmatpush.msra.mxu0 0.0
  %319 = vmatpush.msra.mxu0 0.0
  %320 = vmatpush.msra.mxu0 0.0
  %321 = vmatpush.msra.mxu0 0.0
  %322 = vmatpush.msra.mxu0 %v293
  %323 = vmatpush.msra.mxu0 %v291
  %324 = vmatpush.msra.mxu0 %v289
  %325 = vmatpush.msra.mxu0 %v287
  %326 = vmatpush.msra.mxu0 %v285
  %327 = vmatpush.msra.mxu0 %v283
  %328 = vmatpush.msra.mxu0 %v281
  %329 = vmatpush.msra.mxu0 %v279
  %330 = vmatpush.msra.mxu0 %v277
  %331 = vmatpush.msra.mxu0 %v275
  %332 = vmatpush.msra.mxu0 %v273
  %333 = vmatpush.msra.mxu0 %v271
  %334 = vmatmul.f32.gmra.mxu0 %v296
  %v335 = vpop.f32.mrf.mxu0
  %v336 = vadd.f32 %v316, %v335
  %337 = vdwg.mxu0
  %338 = vmatpush.msra.mxu0 %v270
  %339 = vmatpush.msra.mxu0 %v268
  %340 = vmatpush.msra.mxu0 %v266
  %341 = vmatpush.msra.mxu0 %v264
  %342 = vmatpush.msra.mxu0 %v262
  %343 = vmatpush.msra.mxu0 %v260
  %344 = vmatpush.msra.mxu0 %v258
  %345 = vmatpush.msra.mxu0 %v256
  %346 = vmatpush.msra.mxu0 %v254
  %347 = vmatpush.msra.mxu0 %v252
  %348 = vmatpush.msra.mxu0 %v250
  %349 = vmatpush.msra.mxu0 %v248
  %350 = vmatpush.msra.mxu0 %v246
  %351 = vmatpush.msra.mxu0 %v244
  %352 = vmatpush.msra.mxu0 %v242
  %353 = vmatpush.msra.mxu0 %v240
  %354 = vmatmul.f32.gmra.mxu0 %v237
  %v355 = vpop.f32.mrf.mxu0
  %v356 = vadd.f32 0.0, %v355
  %357 = vdwg.mxu0
  %358 = vmatpush.msra.mxu0 0.0
  %359 = vmatpush.msra.mxu0 0.0
  %360 = vmatpush.msra.mxu0 0.0
  %361 = vmatpush.msra.mxu0 0.0
  %362 = vmatpush.msra.mxu0 %v294
  %363 = vmatpush.msra.mxu0 %v292
  %364 = vmatpush.msra.mxu0 %v290
  %365 = vmatpush.msra.mxu0 %v288
  %366 = vmatpush.msra.mxu0 %v286
  %367 = vmatpush.msra.mxu0 %v284
  %368 = vmatpush.msra.mxu0 %v282
  %369 = vmatpush.msra.mxu0 %v280
  %370 = vmatpush.msra.mxu0 %v278
  %371 = vmatpush.msra.mxu0 %v276
  %372 = vmatpush.msra.mxu0 %v274
  %373 = vmatpush.msra.mxu0 %v272
  %374 = vmatmul.f32.gmra.mxu0 %v296
  %v375 = vpop.f32.mrf.mxu0
  %v376 = vadd.f32 %v356, %v375
  %377 = vdwg.mxu0
  %v378 = vmul.f32 %v336, 0.010204081
  %v379 = vmul.f32 %v376, 0.010204081
  %v380 = vmul.f32 %v378, %v378
  %v381 = vmul.f32 %v379, %v379
  %v384 = vrot.slane %v380, 7
  %v385 = vrot.slane %v381, 7
  %v388 = vsub.f32 %v378, %v384
  %v389 = vsub.f32 %v379, %v385
  %v390 = vmax.f32 %v388, 0.0
  %v391 = vmax.f32 %v389, 0.0
  %v392 = vperm.slane %v378, 0
  %v393 = vperm.slane %v379, 0
  %v394 = vsub.f32 %v168, %v392
  %v395 = vsub.f32 %v191, %v393
  %v396 = vsub.f32 %v171, %v392
  %v397 = vsub.f32 %v194, %v393
  %v398 = vadd.f32 %v390, 1e-05
  %v399 = vadd.f32 %v391, 1e-05
  %v400 = vrsqrt.pop %v398
  %v401 = vmul.f32 %v400, %v398
  %v402 = vmul.f32 %v401, %v400
  %v403 = vmul.f32 0.5, %v402
  %v404 = vsub.f32 1.5, %v403
  %v405 = vmul.f32 %v400, %v404
  %vm406 = vweird.f32 %v398
  %vm407 = vweird.f32 %v400
  %vm408 = vmor %vm406, %vm407
  %v409 = vsel %vm408, %v400, %v405
  %v410 = vrsqrt.pop %v399
  %v411 = vmul.f32 %v410, %v399
  %v412 = vmul.f32 %v411, %v410
  %v413 = vmul.f32 0.5, %v412
  %v414 = vsub.f32 1.5, %v413
  %v415 = vmul.f32 %v410, %v414
  %vm416 = vweird.f32 %v399
  %vm417 = vweird.f32 %v410
  %vm418 = vmor %vm416, %vm417
  %v419 = vsel %vm418, %v410, %v415
  %v420 = vperm.slane %v409, 1
  %v421 = vperm.slane %v419, 1
  %v422 = vmul.f32 %v394, %v420
  %v423 = vmul.f32 %v395, %v421
  %v424 = vmul.f32 %v396, %v420
  %v425 = vmul.f32 %v397, %v421
  %v426 = vld [vmem:[%s3] sm:$0x3]
  %v428 = vperm.slane %v426, 0
  %v429 = vperm.slane %v426, 1
  %v432 = vmul.f32 %v422, %v428
  %v433 = vmul.f32 %v423, %v429
  %v434 = vmul.f32 %v424, %v428
  %v435 = vmul.f32 %v425, %v429
  %v436 = vld [vmem:[%s4] sm:$0x3]
  %v438 = vperm.slane %v436, 0
  %v439 = vperm.slane %v436, 1
  %v442 = vadd.f32 %v432, %v438
  %v443 = vadd.f32 %v433, %v439
  %v444 = vadd.f32 %v434, %v438
  %v445 = vadd.f32 %v435, %v439
  %v446 = vld [vmem:[%s6] sm:$0xff]
  %v447 = vld [vmem:[%s6 + $0x8] sm:$0xff]
  %v448 = vld [vmem:[%s6 + $0x10] sm:$0xff]
  %v449 = vld [vmem:[%s6 + $0x18] sm:$0xff]
  %v450 = vld [vmem:[%s6 + $0x20] sm:$0xff]
  %v451 = vld [vmem:[%s6 + $0x28] sm:$0xff]
  %v452 = vld [vmem:[%s6 + $0x30] sm:$0xff]
  %v453 = vld [vmem:[%s6 + $0x38] sm:$0xff]
  %v454 = vld [vmem:[%s6 + $0x40] sm:$0xff]
  %v455 = vld [vmem:[%s6 + $0x48] sm:$0xff]
  %v456 = vld [vmem:[%s6 + $0x50] sm:$0xff]
  %v457 = vld [vmem:[%s6 + $0x58] sm:$0xff]
  %v458 = vld [vmem:[%s6 + $0x60] sm:$0xff]
  %v459 = vld [vmem:[%s6 + $0x68] sm:$0xff]
  %v460 = vld [vmem:[%s6 + $0x70] sm:$0xff]
  %v461 = vld [vmem:[%s6 + $0x78] sm:$0xff]
  %v462 = vld [vmem:[%s6 + $0x80] sm:$0xff]
  %v463 = vld [vmem:[%s6 + $0x88] sm:$0xff]
  %v464 = vld [vmem:[%s6 + $0x90] sm:$0xff]
  %v465 = vld [vmem:[%s6 + $0x98] sm:$0xff]
  %v466 = vld [vmem:[%s6 + $0xa0] sm:$0xff]
  %v467 = vld [vmem:[%s6 + $0xa8] sm:$0xff]
  %v468 = vld [vmem:[%s6 + $0xb0] sm:$0xff]
  %v469 = vld [vmem:[%s6 + $0xb8] sm:$0xff]
  %v470 = vld [vmem:[%s6 + $0xc0] sm:$0xff]
  %v471 = vld [vmem:[%s6 + $0xc8] sm:$0xff]
  %v472 = vld [vmem:[%s6 + $0xd0] sm:$0xff]
  %v473 = vld [vmem:[%s6 + $0xd8] sm:$0xff]
  %v474 = vld [vmem:[%s6 + $0xe0] sm:$0xff]
  %v475 = vld [vmem:[%s6 + $0xe8] sm:$0xff]
  %v476 = vld [vmem:[%s6 + $0xf0] sm:$0xff]
  %v477 = vld [vmem:[%s6 + $0xf8] sm:$0xff]
  %v478 = vld [vmem:[%s6 + $0x100] sm:$0xff]
  %v479 = vld [vmem:[%s6 + $0x108] sm:$0xff]
  %v480 = vld [vmem:[%s6 + $0x110] sm:$0xff]
  %v481 = vld [vmem:[%s6 + $0x118] sm:$0xff]
  %v482 = vld [vmem:[%s6 + $0x120] sm:$0xff]
  %v483 = vld [vmem:[%s6 + $0x128] sm:$0xff]
  %v484 = vld [vmem:[%s6 + $0x130] sm:$0xff]
  %v485 = vld [vmem:[%s6 + $0x138] sm:$0xff]
  %v486 = vld [vmem:[%s6 + $0x140] sm:$0xff]
  %v487 = vld [vmem:[%s6 + $0x148] sm:$0xff]
  %v488 = vld [vmem:[%s6 + $0x150] sm:$0xff]
  %v489 = vld [vmem:[%s6 + $0x158] sm:$0xff]
  %v490 = vld [vmem:[%s6 + $0x160] sm:$0xff]
  %v491 = vld [vmem:[%s6 + $0x168] sm:$0xff]
  %v492 = vld [vmem:[%s6 + $0x170] sm:$0xff]
  %v493 = vld [vmem:[%s6 + $0x178] sm:$0xff]
  %v494 = vld [vmem:[%s6 + $0x180] sm:$0xff]
  %v495 = vld [vmem:[%s6 + $0x188] sm:$0xff]
  %v496 = vld [vmem:[%s6 + $0x190] sm:$0xff]
  %v497 = vld [vmem:[%s6 + $0x198] sm:$0xff]
  %v498 = vld [vmem:[%s6 + $0x1a0] sm:$0xff]
  %v499 = vld [vmem:[%s6 + $0x1a8] sm:$0xff]
  %v500 = vld [vmem:[%s6 + $0x1b0] sm:$0xff]
  %v501 = vld [vmem:[%s6 + $0x1b8] sm:$0xff]
  %v502 = vld [vmem:[%s6 + $0x1c0] sm:$0xff]
  %v503 = vld [vmem:[%s6 + $0x1c8] sm:$0xff]
  %v504 = vld [vmem:[%s6 + $0x1d0] sm:$0xff]
  %v505 = vld [vmem:[%s6 + $0x1d8] sm:$0xff]
  %v506 = vld [vmem:[%s6 + $0x1e0] sm:$0xff]
  %v507 = vld [vmem:[%s6 + $0x1e8] sm:$0xff]
  %v508 = vld [vmem:[%s6 + $0x1f0] sm:$0xff]
  %v509 = vld [vmem:[%s6 + $0x1f8] sm:$0xff]
  %v510 = vld [vmem:[%s6 + $0x200] sm:$0xff]
  %v511 = vld [vmem:[%s6 + $0x208] sm:$0xff]
  %v512 = vld [vmem:[%s6 + $0x210] sm:$0xff]
  %v513 = vld [vmem:[%s6 + $0x218] sm:$0xff]
  %v514 = vld [vmem:[%s6 + $0x220] sm:$0xff]
  %v515 = vld [vmem:[%s6 + $0x228] sm:$0xff]
  %v516 = vld [vmem:[%s6 + $0x230] sm:$0xff]
  %v517 = vld [vmem:[%s6 + $0x238] sm:$0xff]
  %v518 = vld [vmem:[%s6 + $0x240] sm:$0xff]
  %v519 = vld [vmem:[%s6 + $0x248] sm:$0xff]
  %v520 = vld [vmem:[%s6 + $0x250] sm:$0xff]
  %v521 = vld [vmem:[%s6 + $0x258] sm:$0xff]
  %v522 = vld [vmem:[%s6 + $0x260] sm:$0xff]
  %v523 = vld [vmem:[%s6 + $0x268] sm:$0xff]
  %v524 = vld [vmem:[%s6 + $0x270] sm:$0xff]
  %v525 = vld [vmem:[%s6 + $0x278] sm:$0xff]
  %v526 = vld [vmem:[%s6 + $0x280] sm:$0xff]
  %v527 = vld [vmem:[%s6 + $0x288] sm:$0xff]
  %v528 = vld [vmem:[%s6 + $0x290] sm:$0xff]
  %v529 = vld [vmem:[%s6 + $0x298] sm:$0xff]
  %v530 = vld [vmem:[%s6 + $0x2a0] sm:$0xff]
  %v531 = vld [vmem:[%s6 + $0x2a8] sm:$0xff]
  %v532 = vld [vmem:[%s6 + $0x2b0] sm:$0xff]
  %v533 = vld [vmem:[%s6 + $0x2b8] sm:$0xff]
  %v534 = vld [vmem:[%s6 + $0x2c0] sm:$0xff]
  %v535 = vld [vmem:[%s6 + $0x2c8] sm:$0xff]
  %v536 = vld [vmem:[%s6 + $0x2d0] sm:$0xff]
  %v537 = vld [vmem:[%s6 + $0x2d8] sm:$0xff]
  %v538 = vld [vmem:[%s6 + $0x2e0] sm:$0xff]
  %v539 = vld [vmem:[%s6 + $0x2e8] sm:$0xff]
  %v540 = vld [vmem:[%s6 + $0x2f0] sm:$0xff]
  %v541 = vld [vmem:[%s6 + $0x2f8] sm:$0xff]
  %v542 = vld [vmem:[%s6 + $0x300] sm:$0xff]
  %v543 = vld [vmem:[%s6 + $0x308] sm:$0xff]
  %v544 = vld [vmem:[%s6 + $0x310] sm:$0xff]
  %v545 = vld [vmem:[%s6 + $0x318] sm:$0xff]
  %v546 = vld [vmem:[%s6 + $0x320] sm:$0xff]
  %v547 = vld [vmem:[%s6 + $0x328] sm:$0xff]
  %v548 = vld [vmem:[%s6 + $0x330] sm:$0xff]
  %v549 = vld [vmem:[%s6 + $0x338] sm:$0xff]
  %v550 = vld [vmem:[%s6 + $0x340] sm:$0xff]
  %v551 = vld [vmem:[%s6 + $0x348] sm:$0xff]
  %v552 = vld [vmem:[%s6 + $0x350] sm:$0xff]
  %v553 = vld [vmem:[%s6 + $0x358] sm:$0xff]
  %v554 = vld [vmem:[%s6 + $0x360] sm:$0xff]
  %v555 = vld [vmem:[%s6 + $0x368] sm:$0xff]
  %v556 = vld [vmem:[%s6 + $0x370] sm:$0xff]
  %v557 = vld [vmem:[%s6 + $0x378] sm:$0xff]
  %v558 = vld [vmem:[%s6 + $0x380] sm:$0xff]
  %v559 = vld [vmem:[%s6 + $0x388] sm:$0xff]
  %v560 = vld [vmem:[%s6 + $0x390] sm:$0xff]
  %v561 = vld [vmem:[%s6 + $0x398] sm:$0xff]
  %v562 = vld [vmem:[%s6 + $0x3a0] sm:$0xff]
  %v563 = vld [vmem:[%s6 + $0x3a8] sm:$0xff]
  %v564 = vld [vmem:[%s6 + $0x3b0] sm:$0xff]
  %v565 = vld [vmem:[%s6 + $0x3b8] sm:$0xff]
  %v566 = vld [vmem:[%s6 + $0x3c0] sm:$0xff]
  %v567 = vld [vmem:[%s6 + $0x3c8] sm:$0xff]
  %v568 = vld [vmem:[%s6 + $0x3d0] sm:$0xff]
  %v569 = vld [vmem:[%s6 + $0x3d8] sm:$0xff]
  %v570 = vld [vmem:[%s6 + $0x3e0] sm:$0xff]
  %v571 = vld [vmem:[%s6 + $0x3e8] sm:$0xff]
  %v572 = vld [vmem:[%s6 + $0x3f0] sm:$0xff]
  %v573 = vld [vmem:[%s6 + $0x3f8] sm:$0xff]
  %v574 = vld [vmem:[%s6 + $0x400] sm:$0xff]
  %v575 = vld [vmem:[%s6 + $0x408] sm:$0xff]
  %v576 = vld [vmem:[%s6 + $0x410] sm:$0xff]
  %v577 = vld [vmem:[%s6 + $0x418] sm:$0xff]
  %v578 = vld [vmem:[%s6 + $0x420] sm:$0xff]
  %v579 = vld [vmem:[%s6 + $0x428] sm:$0xff]
  %v580 = vld [vmem:[%s6 + $0x430] sm:$0xff]
  %v581 = vld [vmem:[%s6 + $0x438] sm:$0xff]
  %v582 = vld [vmem:[%s6 + $0x440] sm:$0xff]
  %v583 = vld [vmem:[%s6 + $0x448] sm:$0xff]
  %v584 = vld [vmem:[%s6 + $0x450] sm:$0xff]
  %v585 = vld [vmem:[%s6 + $0x458] sm:$0xff]
  %v586 = vld [vmem:[%s6 + $0x460] sm:$0xff]
  %v587 = vld [vmem:[%s6 + $0x468] sm:$0xff]
  %v588 = vld [vmem:[%s6 + $0x470] sm:$0xff]
  %v589 = vld [vmem:[%s6 + $0x478] sm:$0xff]
  %v590 = vld [vmem:[%s6 + $0x480] sm:$0xff]
  %v591 = vld [vmem:[%s6 + $0x488] sm:$0xff]
  %v592 = vld [vmem:[%s6 + $0x490] sm:$0xff]
  %v593 = vld [vmem:[%s6 + $0x498] sm:$0xff]
  %v594 = vld [vmem:[%s6 + $0x4a0] sm:$0xff]
  %v595 = vld [vmem:[%s6 + $0x4a8] sm:$0xff]
  %v596 = vld [vmem:[%s6 + $0x4b0] sm:$0xff]
  %v597 = vld [vmem:[%s6 + $0x4b8] sm:$0xff]
  %v598 = vld [vmem:[%s6 + $0x4c0] sm:$0xff]
  %v599 = vld [vmem:[%s6 + $0x4c8] sm:$0xff]
  %v600 = vld [vmem:[%s6 + $0x4d0] sm:$0xff]
  %v601 = vld [vmem:[%s6 + $0x4d8] sm:$0xff]
  %v602 = vld [vmem:[%s6 + $0x4e0] sm:$0xff]
  %v603 = vld [vmem:[%s6 + $0x4e8] sm:$0xff]
  %v604 = vld [vmem:[%s6 + $0x4f0] sm:$0xff]
  %v605 = vld [vmem:[%s6 + $0x4f8] sm:$0xff]
  %v606 = vld [vmem:[%s6 + $0x500] sm:$0xff]
  %v607 = vld [vmem:[%s6 + $0x508] sm:$0xff]
  %v608 = vld [vmem:[%s6 + $0x510] sm:$0xff]
  %v609 = vld [vmem:[%s6 + $0x518] sm:$0xff]
  %v610 = vld [vmem:[%s6 + $0x520] sm:$0xff]
  %v611 = vld [vmem:[%s6 + $0x528] sm:$0xff]
  %v612 = vld [vmem:[%s6 + $0x530] sm:$0xff]
  %v613 = vld [vmem:[%s6 + $0x538] sm:$0xff]
  %v614 = vld [vmem:[%s6 + $0x540] sm:$0xff]
  %v615 = vld [vmem:[%s6 + $0x548] sm:$0xff]
  %v616 = vld [vmem:[%s6 + $0x550] sm:$0xff]
  %v617 = vld [vmem:[%s6 + $0x558] sm:$0xff]
  %v618 = vld [vmem:[%s6 + $0x560] sm:$0xff]
  %v619 = vld [vmem:[%s6 + $0x568] sm:$0xff]
  %v620 = vld [vmem:[%s6 + $0x570] sm:$0xff]
  %v621 = vld [vmem:[%s6 + $0x578] sm:$0xff]
  %v622 = vld [vmem:[%s6 + $0x580] sm:$0xff]
  %v623 = vld [vmem:[%s6 + $0x588] sm:$0xff]
  %v624 = vld [vmem:[%s6 + $0x590] sm:$0xff]
  %v625 = vld [vmem:[%s6 + $0x598] sm:$0xff]
  %v626 = vld [vmem:[%s6 + $0x5a0] sm:$0xff]
  %v627 = vld [vmem:[%s6 + $0x5a8] sm:$0xff]
  %v628 = vld [vmem:[%s6 + $0x5b0] sm:$0xff]
  %v629 = vld [vmem:[%s6 + $0x5b8] sm:$0xff]
  %v630 = vld [vmem:[%s6 + $0x5c0] sm:$0xff]
  %v631 = vld [vmem:[%s6 + $0x5c8] sm:$0xff]
  %v632 = vld [vmem:[%s6 + $0x5d0] sm:$0xff]
  %v633 = vld [vmem:[%s6 + $0x5d8] sm:$0xff]
  %v634 = vld [vmem:[%s6 + $0x5e0] sm:$0xff]
  %v635 = vld [vmem:[%s6 + $0x5e8] sm:$0xff]
  %v636 = vld [vmem:[%s6 + $0x5f0] sm:$0xff]
  %v637 = vld [vmem:[%s6 + $0x5f8] sm:$0xff]
  %v638 = vld [vmem:[%s6 + $0x600] sm:$0xff]
  %v639 = vld [vmem:[%s6 + $0x608] sm:$0xff]
  %v640 = vld [vmem:[%s6 + $0x610] sm:$0xff]
  %v641 = vld [vmem:[%s6 + $0x618] sm:$0xff]
  %v642 = vld [vmem:[%s6 + $0x620] sm:$0xff]
  %v643 = vld [vmem:[%s6 + $0x628] sm:$0xff]
  %v644 = vld [vmem:[%s6 + $0x630] sm:$0xff]
  %v645 = vld [vmem:[%s6 + $0x638] sm:$0xff]
  %v646 = vld [vmem:[%s6 + $0x640] sm:$0xff]
  %v647 = vld [vmem:[%s6 + $0x648] sm:$0xff]
  %v648 = vld [vmem:[%s6 + $0x650] sm:$0xff]
  %v649 = vld [vmem:[%s6 + $0x658] sm:$0xff]
  %v650 = vld [vmem:[%s6 + $0x660] sm:$0xff]
  %v651 = vld [vmem:[%s6 + $0x668] sm:$0xff]
  %v652 = vld [vmem:[%s6 + $0x670] sm:$0xff]
  %v653 = vld [vmem:[%s6 + $0x678] sm:$0xff]
  %v654 = vld [vmem:[%s6 + $0x680] sm:$0xff]
  %v655 = vld [vmem:[%s6 + $0x688] sm:$0xff]
  %v656 = vld [vmem:[%s6 + $0x690] sm:$0xff]
  %v657 = vld [vmem:[%s6 + $0x698] sm:$0xff]
  %v658 = vld [vmem:[%s6 + $0x6a0] sm:$0xff]
  %v659 = vld [vmem:[%s6 + $0x6a8] sm:$0xff]
  %v660 = vld [vmem:[%s6 + $0x6b0] sm:$0xff]
  %v661 = vld [vmem:[%s6 + $0x6b8] sm:$0xff]
  %v662 = vld [vmem:[%s6 + $0x6c0] sm:$0xff]
  %v663 = vld [vmem:[%s6 + $0x6c8] sm:$0xff]
  %v664 = vld [vmem:[%s6 + $0x6d0] sm:$0xff]
  %v665 = vld [vmem:[%s6 + $0x6d8] sm:$0xff]
  %v666 = vld [vmem:[%s6 + $0x6e0] sm:$0xff]
  %v667 = vld [vmem:[%s6 + $0x6e8] sm:$0xff]
  %v668 = vld [vmem:[%s6 + $0x6f0] sm:$0xff]
  %v669 = vld [vmem:[%s6 + $0x6f8] sm:$0xff]
  %v670 = vld [vmem:[%s6 + $0x700] sm:$0xff]
  %v671 = vld [vmem:[%s6 + $0x708] sm:$0xff]
  %v672 = vld [vmem:[%s6 + $0x710] sm:$0xff]
  %v673 = vld [vmem:[%s6 + $0x718] sm:$0xff]
  %v674 = vld [vmem:[%s6 + $0x720] sm:$0xff]
  %v675 = vld [vmem:[%s6 + $0x728] sm:$0xff]
  %v676 = vld [vmem:[%s6 + $0x730] sm:$0xff]
  %v677 = vld [vmem:[%s6 + $0x738] sm:$0xff]
  %v678 = vld [vmem:[%s6 + $0x740] sm:$0xff]
  %v679 = vld [vmem:[%s6 + $0x748] sm:$0xff]
  %v680 = vld [vmem:[%s6 + $0x750] sm:$0xff]
  %v681 = vld [vmem:[%s6 + $0x758] sm:$0xff]
  %v682 = vld [vmem:[%s6 + $0x760] sm:$0xff]
  %v683 = vld [vmem:[%s6 + $0x768] sm:$0xff]
  %v684 = vld [vmem:[%s6 + $0x770] sm:$0xff]
  %v685 = vld [vmem:[%s6 + $0x778] sm:$0xff]
  %v686 = vld [vmem:[%s6 + $0x780] sm:$0xff]
  %v687 = vld [vmem:[%s6 + $0x788] sm:$0xff]
  %v688 = vld [vmem:[%s6 + $0x790] sm:$0xff]
  %v689 = vld [vmem:[%s6 + $0x798] sm:$0xff]
  %v690 = vld [vmem:[%s6 + $0x7a0] sm:$0xff]
  %v691 = vld [vmem:[%s6 + $0x7a8] sm:$0xff]
  %v692 = vld [vmem:[%s6 + $0x7b0] sm:$0xff]
  %v693 = vld [vmem:[%s6 + $0x7b8] sm:$0xff]
  %v694 = vld [vmem:[%s6 + $0x7c0] sm:$0xff]
  %v695 = vld [vmem:[%s6 + $0x7c8] sm:$0xff]
  %v696 = vld [vmem:[%s6 + $0x7d0] sm:$0xff]
  %v697 = vld [vmem:[%s6 + $0x7d8] sm:$0xff]
  %v698 = vld [vmem:[%s6 + $0x7e0] sm:$0xff]
  %v699 = vld [vmem:[%s6 + $0x7e8] sm:$0xff]
  %v700 = vld [vmem:[%s6 + $0x7f0] sm:$0xff]
  %v701 = vld [vmem:[%s6 + $0x7f8] sm:$0xff]
  %v702 = vld [vmem:[%s6 + $0x800] sm:$0xff]
  %v703 = vld [vmem:[%s6 + $0x808] sm:$0xff]
  %v704 = vld [vmem:[%s6 + $0x810] sm:$0xff]
  %v705 = vld [vmem:[%s6 + $0x818] sm:$0xff]
  %v706 = vld [vmem:[%s6 + $0x820] sm:$0xff]
  %v707 = vld [vmem:[%s6 + $0x828] sm:$0xff]
  %v708 = vld [vmem:[%s6 + $0x830] sm:$0xff]
  %v709 = vld [vmem:[%s6 + $0x838] sm:$0xff]
  %v710 = vld [vmem:[%s6 + $0x840] sm:$0xff]
  %v711 = vld [vmem:[%s6 + $0x848] sm:$0xff]
  %v712 = vld [vmem:[%s6 + $0x850] sm:$0xff]
  %v713 = vld [vmem:[%s6 + $0x858] sm:$0xff]
  %v714 = vld [vmem:[%s6 + $0x860] sm:$0xff]
  %v715 = vld [vmem:[%s6 + $0x868] sm:$0xff]
  %v716 = vld [vmem:[%s6 + $0x870] sm:$0xff]
  %v717 = vld [vmem:[%s6 + $0x878] sm:$0xff]
  %v718 = vld [vmem:[%s6 + $0x880] sm:$0xff]
  %v719 = vld [vmem:[%s6 + $0x888] sm:$0xff]
  %v720 = vld [vmem:[%s6 + $0x890] sm:$0xff]
  %v721 = vld [vmem:[%s6 + $0x898] sm:$0xff]
  %v722 = vld [vmem:[%s6 + $0x8a0] sm:$0xff]
  %v723 = vld [vmem:[%s6 + $0x8a8] sm:$0xff]
  %v724 = vld [vmem:[%s6 + $0x8b0] sm:$0xff]
  %v725 = vld [vmem:[%s6 + $0x8b8] sm:$0xff]
  %v726 = vld [vmem:[%s6 + $0x8c0] sm:$0xff]
  %v727 = vld [vmem:[%s6 + $0x8c8] sm:$0xff]
  %v728 = vld [vmem:[%s6 + $0x8d0] sm:$0xff]
  %v729 = vld [vmem:[%s6 + $0x8d8] sm:$0xff]
  %v730 = vld [vmem:[%s6 + $0x8e0] sm:$0xff]
  %v731 = vld [vmem:[%s6 + $0x8e8] sm:$0xff]
  %v732 = vld [vmem:[%s6 + $0x8f0] sm:$0xff]
  %v733 = vld [vmem:[%s6 + $0x8f8] sm:$0xff]
  %v734 = vld [vmem:[%s6 + $0x900] sm:$0xff]
  %v735 = vld [vmem:[%s6 + $0x908] sm:$0xff]
  %v736 = vld [vmem:[%s6 + $0x910] sm:$0xff]
  %v737 = vld [vmem:[%s6 + $0x918] sm:$0xff]
  %v738 = vld [vmem:[%s6 + $0x920] sm:$0xff]
  %v739 = vld [vmem:[%s6 + $0x928] sm:$0xff]
  %v740 = vld [vmem:[%s6 + $0x930] sm:$0xff]
  %v741 = vld [vmem:[%s6 + $0x938] sm:$0xff]
  %v742 = vld [vmem:[%s6 + $0x940] sm:$0xff]
  %v743 = vld [vmem:[%s6 + $0x948] sm:$0xff]
  %v744 = vld [vmem:[%s6 + $0x950] sm:$0xff]
  %v745 = vld [vmem:[%s6 + $0x958] sm:$0xff]
  %v746 = vld [vmem:[%s6 + $0x960] sm:$0xff]
  %v747 = vld [vmem:[%s6 + $0x968] sm:$0xff]
  %v748 = vld [vmem:[%s6 + $0x970] sm:$0xff]
  %v749 = vld [vmem:[%s6 + $0x978] sm:$0xff]
  %v750 = vld [vmem:[%s6 + $0x980] sm:$0xff]
  %v751 = vld [vmem:[%s6 + $0x988] sm:$0xff]
  %v752 = vld [vmem:[%s6 + $0x990] sm:$0xff]
  %v753 = vld [vmem:[%s6 + $0x998] sm:$0xff]
  %v754 = vld [vmem:[%s6 + $0x9a0] sm:$0xff]
  %v755 = vld [vmem:[%s6 + $0x9a8] sm:$0xff]
  %v756 = vld [vmem:[%s6 + $0x9b0] sm:$0xff]
  %v757 = vld [vmem:[%s6 + $0x9b8] sm:$0xff]
  %v758 = vld [vmem:[%s6 + $0x9c0] sm:$0xff]
  %v759 = vld [vmem:[%s6 + $0x9c8] sm:$0xff]
  %v760 = vld [vmem:[%s6 + $0x9d0] sm:$0xff]
  %v761 = vld [vmem:[%s6 + $0x9d8] sm:$0xff]
  %v762 = vld [vmem:[%s6 + $0x9e0] sm:$0xff]
  %v763 = vld [vmem:[%s6 + $0x9e8] sm:$0xff]
  %v764 = vld [vmem:[%s6 + $0x9f0] sm:$0xff]
  %v765 = vld [vmem:[%s6 + $0x9f8] sm:$0xff]
  %v766 = vld [vmem:[%s6 + $0xa00] sm:$0xff]
  %v767 = vld [vmem:[%s6 + $0xa08] sm:$0xff]
  %v768 = vld [vmem:[%s6 + $0xa10] sm:$0xff]
  %v769 = vld [vmem:[%s6 + $0xa18] sm:$0xff]
  %v770 = vld [vmem:[%s6 + $0xa20] sm:$0xff]
  %v771 = vld [vmem:[%s6 + $0xa28] sm:$0xff]
  %v772 = vld [vmem:[%s6 + $0xa30] sm:$0xff]
  %v773 = vld [vmem:[%s6 + $0xa38] sm:$0xff]
  %v774 = vld [vmem:[%s6 + $0xa40] sm:$0xff]
  %v775 = vld [vmem:[%s6 + $0xa48] sm:$0xff]
  %v776 = vld [vmem:[%s6 + $0xa50] sm:$0xff]
  %v777 = vld [vmem:[%s6 + $0xa58] sm:$0xff]
  %v778 = vld [vmem:[%s6 + $0xa60] sm:$0xff]
  %v779 = vld [vmem:[%s6 + $0xa68] sm:$0xff]
  %v780 = vld [vmem:[%s6 + $0xa70] sm:$0xff]
  %v781 = vld [vmem:[%s6 + $0xa78] sm:$0xff]
  %v783 = vsel %vm204, %v443, 0
  %v786 = vsel %vm204, %v445, 0
  %788 = vmatpush.msra.mxu0 %v626
  %789 = vmatpush.msra.mxu0 %v614
  %790 = vmatpush.msra.mxu0 %v602
  %791 = vmatpush.msra.mxu0 %v590
  %792 = vmatpush.msra.mxu0 %v578
  %793 = vmatpush.msra.mxu0 %v566
  %794 = vmatpush.msra.mxu0 %v554
  %795 = vmatpush.msra.mxu0 %v542
  %796 = vmatpush.msra.mxu0 %v530
  %797 = vmatpush.msra.mxu0 %v518
  %798 = vmatpush.msra.mxu0 %v506
  %799 = vmatpush.msra.mxu0 %v494
  %800 = vmatpush.msra.mxu0 %v482
  %801 = vmatpush.msra.mxu0 %v470
  %802 = vmatpush.msra.mxu0 %v458
  %803 = vmatpush.msra.mxu0 %v446
  %804 = vmatmul.f32.gmra.mxu0 %v442
  %v805 = vpop.f32.mrf.mxu0
  %v806 = vadd.f32 0.0, %v805
  %807 = vmatmul.f32.gmra.mxu0 %v444
  %v808 = vpop.f32.mrf.mxu0
  %v809 = vadd.f32 0.0, %v808
  %810 = vdwg.mxu0
  %811 = vmatpush.msra.mxu0 0.0
  %812 = vmatpush.msra.mxu0 0.0
  %813 = vmatpush.msra.mxu0 0.0
  %814 = vmatpush.msra.mxu0 0.0
  %815 = vmatpush.msra.mxu0 %v770
  %816 = vmatpush.msra.mxu0 %v758
  %817 = vmatpush.msra.mxu0 %v746
  %818 = vmatpush.msra.mxu0 %v734
  %819 = vmatpush.msra.mxu0 %v722
  %820 = vmatpush.msra.mxu0 %v710
  %821 = vmatpush.msra.mxu0 %v698
  %822 = vmatpush.msra.mxu0 %v686
  %823 = vmatpush.msra.mxu0 %v674
  %824 = vmatpush.msra.mxu0 %v662
  %825 = vmatpush.msra.mxu0 %v650
  %826 = vmatpush.msra.mxu0 %v638
  %827 = vmatmul.f32.gmra.mxu0 %v783
  %v828 = vpop.f32.mrf.mxu0
  %v829 = vadd.f32 %v806, %v828
  %830 = vmatmul.f32.gmra.mxu0 %v786
  %v831 = vpop.f32.mrf.mxu0
  %v832 = vadd.f32 %v809, %v831
  %833 = vdwg.mxu0
  %834 = vmatpush.msra.mxu0 %v627
  %835 = vmatpush.msra.mxu0 %v615
  %836 = vmatpush.msra.mxu0 %v603
  %837 = vmatpush.msra.mxu0 %v591
  %838 = vmatpush.msra.mxu0 %v579
  %839 = vmatpush.msra.mxu0 %v567
  %840 = vmatpush.msra.mxu0 %v555
  %841 = vmatpush.msra.mxu0 %v543
  %842 = vmatpush.msra.mxu0 %v531
  %843 = vmatpush.msra.mxu0 %v519
  %844 = vmatpush.msra.mxu0 %v507
  %845 = vmatpush.msra.mxu0 %v495
  %846 = vmatpush.msra.mxu0 %v483
  %847 = vmatpush.msra.mxu0 %v471
  %848 = vmatpush.msra.mxu0 %v459
  %849 = vmatpush.msra.mxu0 %v447
  %850 = vmatmul.f32.gmra.mxu0 %v442
  %v851 = vpop.f32.mrf.mxu0
  %v852 = vadd.f32 0.0, %v851
  %853 = vmatmul.f32.gmra.mxu0 %v444
  %v854 = vpop.f32.mrf.mxu0
  %v855 = vadd.f32 0.0, %v854
  %856 = vdwg.mxu0
  %857 = vmatpush.msra.mxu0 0.0
  %858 = vmatpush.msra.mxu0 0.0
  %859 = vmatpush.msra.mxu0 0.0
  %860 = vmatpush.msra.mxu0 0.0
  %861 = vmatpush.msra.mxu0 %v771
  %862 = vmatpush.msra.mxu0 %v759
  %863 = vmatpush.msra.mxu0 %v747
  %864 = vmatpush.msra.mxu0 %v735
  %865 = vmatpush.msra.mxu0 %v723
  %866 = vmatpush.msra.mxu0 %v711
  %867 = vmatpush.msra.mxu0 %v699
  %868 = vmatpush.msra.mxu0 %v687
  %869 = vmatpush.msra.mxu0 %v675
  %870 = vmatpush.msra.mxu0 %v663
  %871 = vmatpush.msra.mxu0 %v651
  %872 = vmatpush.msra.mxu0 %v639
  %873 = vmatmul.f32.gmra.mxu0 %v783
  %v874 = vpop.f32.mrf.mxu0
  %v875 = vadd.f32 %v852, %v874
  %876 = vmatmul.f32.gmra.mxu0 %v786
  %v877 = vpop.f32.mrf.mxu0
  %v878 = vadd.f32 %v855, %v877
  %879 = vdwg.mxu0
  %880 = vmatpush.msra.mxu0 %v628
  %881 = vmatpush.msra.mxu0 %v616
  %882 = vmatpush.msra.mxu0 %v604
  %883 = vmatpush.msra.mxu0 %v592
  %884 = vmatpush.msra.mxu0 %v580
  %885 = vmatpush.msra.mxu0 %v568
  %886 = vmatpush.msra.mxu0 %v556
  %887 = vmatpush.msra.mxu0 %v544
  %888 = vmatpush.msra.mxu0 %v532
  %889 = vmatpush.msra.mxu0 %v520
  %890 = vmatpush.msra.mxu0 %v508
  %891 = vmatpush.msra.mxu0 %v496
  %892 = vmatpush.msra.mxu0 %v484
  %893 = vmatpush.msra.mxu0 %v472
  %894 = vmatpush.msra.mxu0 %v460
  %895 = vmatpush.msra.mxu0 %v448
  %896 = vmatmul.f32.gmra.mxu0 %v442
  %v897 = vpop.f32.mrf.mxu0
  %v898 = vadd.f32 0.0, %v897
  %899 = vmatmul.f32.gmra.mxu0 %v444
  %v900 = vpop.f32.mrf.mxu0
  %v901 = vadd.f32 0.0, %v900
  %902 = vdwg.mxu0
  %903 = vmatpush.msra.mxu0 0.0
  %904 = vmatpush.msra.mxu0 0.0
  %905 = vmatpush.msra.mxu0 0.0
  %906 = vmatpush.msra.mxu0 0.0
  %907 = vmatpush.msra.mxu0 %v772
  %908 = vmatpush.msra.mxu0 %v760
  %909 = vmatpush.msra.mxu0 %v748
  %910 = vmatpush.msra.mxu0 %v736
  %911 = vmatpush.msra.mxu0 %v724
  %912 = vmatpush.msra.mxu0 %v712
  %913 = vmatpush.msra.mxu0 %v700
  %914 = vmatpush.msra.mxu0 %v688
  %915 = vmatpush.msra.mxu0 %v676
  %916 = vmatpush.msra.mxu0 %v664
  %917 = vmatpush.msra.mxu0 %v652
  %918 = vmatpush.msra.mxu0 %v640
  %919 = vmatmul.f32.gmra.mxu0 %v783
  %v920 = vpop.f32.mrf.mxu0
  %v921 = vadd.f32 %v898, %v920
  %922 = vmatmul.f32.gmra.mxu0 %v786
  %v923 = vpop.f32.mrf.mxu0
  %v924 = vadd.f32 %v901, %v923
  %925 = vdwg.mxu0
  %926 = vmatpush.msra.mxu0 %v629
  %927 = vmatpush.msra.mxu0 %v617
  %928 = vmatpush.msra.mxu0 %v605
  %929 = vmatpush.msra.mxu0 %v593
  %930 = vmatpush.msra.mxu0 %v581
  %931 = vmatpush.msra.mxu0 %v569
  %932 = vmatpush.msra.mxu0 %v557
  %933 = vmatpush.msra.mxu0 %v545
  %934 = vmatpush.msra.mxu0 %v533
  %935 = vmatpush.msra.mxu0 %v521
  %936 = vmatpush.msra.mxu0 %v509
  %937 = vmatpush.msra.mxu0 %v497
  %938 = vmatpush.msra.mxu0 %v485
  %939 = vmatpush.msra.mxu0 %v473
  %940 = vmatpush.msra.mxu0 %v461
  %941 = vmatpush.msra.mxu0 %v449
  %942 = vmatmul.f32.gmra.mxu0 %v442
  %v943 = vpop.f32.mrf.mxu0
  %v944 = vadd.f32 0.0, %v943
  %945 = vmatmul.f32.gmra.mxu0 %v444
  %v946 = vpop.f32.mrf.mxu0
  %v947 = vadd.f32 0.0, %v946
  %948 = vdwg.mxu0
  %949 = vmatpush.msra.mxu0 0.0
  %950 = vmatpush.msra.mxu0 0.0
  %951 = vmatpush.msra.mxu0 0.0
  %952 = vmatpush.msra.mxu0 0.0
  %953 = vmatpush.msra.mxu0 %v773
  %954 = vmatpush.msra.mxu0 %v761
  %955 = vmatpush.msra.mxu0 %v749
  %956 = vmatpush.msra.mxu0 %v737
  %957 = vmatpush.msra.mxu0 %v725
  %958 = vmatpush.msra.mxu0 %v713
  %959 = vmatpush.msra.mxu0 %v701
  %960 = vmatpush.msra.mxu0 %v689
  %961 = vmatpush.msra.mxu0 %v677
  %962 = vmatpush.msra.mxu0 %v665
  %963 = vmatpush.msra.mxu0 %v653
  %964 = vmatpush.msra.mxu0 %v641
  %965 = vmatmul.f32.gmra.mxu0 %v783
  %v966 = vpop.f32.mrf.mxu0
  %v967 = vadd.f32 %v944, %v966
  %968 = vmatmul.f32.gmra.mxu0 %v786
  %v969 = vpop.f32.mrf.mxu0
  %v970 = vadd.f32 %v947, %v969
  %971 = vdwg.mxu0
  %972 = vmatpush.msra.mxu0 %v630
  %973 = vmatpush.msra.mxu0 %v618
  %974 = vmatpush.msra.mxu0 %v606
  %975 = vmatpush.msra.mxu0 %v594
  %976 = vmatpush.msra.mxu0 %v582
  %977 = vmatpush.msra.mxu0 %v570
  %978 = vmatpush.msra.mxu0 %v558
  %979 = vmatpush.msra.mxu0 %v546
  %980 = vmatpush.msra.mxu0 %v534
  %981 = vmatpush.msra.mxu0 %v522
  %982 = vmatpush.msra.mxu0 %v510
  %983 = vmatpush.msra.mxu0 %v498
  %984 = vmatpush.msra.mxu0 %v486
  %985 = vmatpush.msra.mxu0 %v474
  %986 = vmatpush.msra.mxu0 %v462
  %987 = vmatpush.msra.mxu0 %v450
  %988 = vmatmul.f32.gmra.mxu0 %v442
  %v989 = vpop.f32.mrf.mxu0
  %v990 = vadd.f32 0.0, %v989
  %991 = vmatmul.f32.gmra.mxu0 %v444
  %v992 = vpop.f32.mrf.mxu0
  %v993 = vadd.f32 0.0, %v992
  %994 = vdwg.mxu0
  %995 = vmatpush.msra.mxu0 0.0
  %996 = vmatpush.msra.mxu0 0.0
  %997 = vmatpush.msra.mxu0 0.0
  %998 = vmatpush.msra.mxu0 0.0
  %999 = vmatpush.msra.mxu0 %v774
  %1000 = vmatpush.msra.mxu0 %v762
  %1001 = vmatpush.msra.mxu0 %v750
  %1002 = vmatpush.msra.mxu0 %v738
  %1003 = vmatpush.msra.mxu0 %v726
  %1004 = vmatpush.msra.mxu0 %v714
  %1005 = vmatpush.msra.mxu0 %v702
  %1006 = vmatpush.msra.mxu0 %v690
  %1007 = vmatpush.msra.mxu0 %v678
  %1008 = vmatpush.msra.mxu0 %v666
  %1009 = vmatpush.msra.mxu0 %v654
  %1010 = vmatpush.msra.mxu0 %v642
  %1011 = vmatmul.f32.gmra.mxu0 %v783
  %v1012 = vpop.f32.mrf.mxu0
  %v1013 = vadd.f32 %v990, %v1012
  %1014 = vmatmul.f32.gmra.mxu0 %v786
  %v1015 = vpop.f32.mrf.mxu0
  %v1016 = vadd.f32 %v993, %v1015
  %1017 = vdwg.mxu0
  %1018 = vmatpush.msra.mxu0 %v631
  %1019 = vmatpush.msra.mxu0 %v619
  %1020 = vmatpush.msra.mxu0 %v607
  %1021 = vmatpush.msra.mxu0 %v595
  %1022 = vmatpush.msra.mxu0 %v583
  %1023 = vmatpush.msra.mxu0 %v571
  %1024 = vmatpush.msra.mxu0 %v559
  %1025 = vmatpush.msra.mxu0 %v547
  %1026 = vmatpush.msra.mxu0 %v535
  %1027 = vmatpush.msra.mxu0 %v523
  %1028 = vmatpush.msra.mxu0 %v511
  %1029 = vmatpush.msra.mxu0 %v499
  %1030 = vmatpush.msra.mxu0 %v487
  %1031 = vmatpush.msra.mxu0 %v475
  %1032 = vmatpush.msra.mxu0 %v463
  %1033 = vmatpush.msra.mxu0 %v451
  %1034 = vmatmul.f32.gmra.mxu0 %v442
  %v1035 = vpop.f32.mrf.mxu0
  %v1036 = vadd.f32 0.0, %v1035
  %1037 = vmatmul.f32.gmra.mxu0 %v444
  %v1038 = vpop.f32.mrf.mxu0
  %v1039 = vadd.f32 0.0, %v1038
  %1040 = vdwg.mxu0
  %1041 = vmatpush.msra.mxu0 0.0
  %1042 = vmatpush.msra.mxu0 0.0
  %1043 = vmatpush.msra.mxu0 0.0
  %1044 = vmatpush.msra.mxu0 0.0
  %1045 = vmatpush.msra.mxu0 %v775
  %1046 = vmatpush.msra.mxu0 %v763
  %1047 = vmatpush.msra.mxu0 %v751
  %1048 = vmatpush.msra.mxu0 %v739
  %1049 = vmatpush.msra.mxu0 %v727
  %1050 = vmatpush.msra.mxu0 %v715
  %1051 = vmatpush.msra.mxu0 %v703
  %1052 = vmatpush.msra.mxu0 %v691
  %1053 = vmatpush.msra.mxu0 %v679
  %1054 = vmatpush.msra.mxu0 %v667
  %1055 = vmatpush.msra.mxu0 %v655
  %1056 = vmatpush.msra.mxu0 %v643
  %1057 = vmatmul.f32.gmra.mxu0 %v783
  %v1058 = vpop.f32.mrf.mxu0
  %v1059 = vadd.f32 %v1036, %v1058
  %1060 = vmatmul.f32.gmra.mxu0 %v786
  %v1061 = vpop.f32.mrf.mxu0
  %v1062 = vadd.f32 %v1039, %v1061
  %1063 = vdwg.mxu0
  %1064 = vmatpush.msra.mxu0 %v632
  %1065 = vmatpush.msra.mxu0 %v620
  %1066 = vmatpush.msra.mxu0 %v608
  %1067 = vmatpush.msra.mxu0 %v596
  %1068 = vmatpush.msra.mxu0 %v584
  %1069 = vmatpush.msra.mxu0 %v572
  %1070 = vmatpush.msra.mxu0 %v560
  %1071 = vmatpush.msra.mxu0 %v548
  %1072 = vmatpush.msra.mxu0 %v536
  %1073 = vmatpush.msra.mxu0 %v524
  %1074 = vmatpush.msra.mxu0 %v512
  %1075 = vmatpush.msra.mxu0 %v500
  %1076 = vmatpush.msra.mxu0 %v488
  %1077 = vmatpush.msra.mxu0 %v476
  %1078 = vmatpush.msra.mxu0 %v464
  %1079 = vmatpush.msra.mxu0 %v452
  %1080 = vmatmul.f32.gmra.mxu0 %v442
  %v1081 = vpop.f32.mrf.mxu0
  %v1082 = vadd.f32 0.0, %v1081
  %1083 = vmatmul.f32.gmra.mxu0 %v444
  %v1084 = vpop.f32.mrf.mxu0
  %v1085 = vadd.f32 0.0, %v1084
  %1086 = vdwg.mxu0
  %1087 = vmatpush.msra.mxu0 0.0
  %1088 = vmatpush.msra.mxu0 0.0
  %1089 = vmatpush.msra.mxu0 0.0
  %1090 = vmatpush.msra.mxu0 0.0
  %1091 = vmatpush.msra.mxu0 %v776
  %1092 = vmatpush.msra.mxu0 %v764
  %1093 = vmatpush.msra.mxu0 %v752
  %1094 = vmatpush.msra.mxu0 %v740
  %1095 = vmatpush.msra.mxu0 %v728
  %1096 = vmatpush.msra.mxu0 %v716
  %1097 = vmatpush.msra.mxu0 %v704
  %1098 = vmatpush.msra.mxu0 %v692
  %1099 = vmatpush.msra.mxu0 %v680
  %1100 = vmatpush.msra.mxu0 %v668
  %1101 = vmatpush.msra.mxu0 %v656
  %1102 = vmatpush.msra.mxu0 %v644
  %1103 = vmatmul.f32.gmra.mxu0 %v783
  %v1104 = vpop.f32.mrf.mxu0
  %v1105 = vadd.f32 %v1082, %v1104
  %1106 = vmatmul.f32.gmra.mxu0 %v786
  %v1107 = vpop.f32.mrf.mxu0
  %v1108 = vadd.f32 %v1085, %v1107
  %1109 = vdwg.mxu0
  %1110 = vmatpush.msra.mxu0 %v633
  %1111 = vmatpush.msra.mxu0 %v621
  %1112 = vmatpush.msra.mxu0 %v609
  %1113 = vmatpush.msra.mxu0 %v597
  %1114 = vmatpush.msra.mxu0 %v585
  %1115 = vmatpush.msra.mxu0 %v573
  %1116 = vmatpush.msra.mxu0 %v561
  %1117 = vmatpush.msra.mxu0 %v549
  %1118 = vmatpush.msra.mxu0 %v537
  %1119 = vmatpush.msra.mxu0 %v525
  %1120 = vmatpush.msra.mxu0 %v513
  %1121 = vmatpush.msra.mxu0 %v501
  %1122 = vmatpush.msra.mxu0 %v489
  %1123 = vmatpush.msra.mxu0 %v477
  %1124 = vmatpush.msra.mxu0 %v465
  %1125 = vmatpush.msra.mxu0 %v453
  %1126 = vmatmul.f32.gmra.mxu0 %v442
  %v1127 = vpop.f32.mrf.mxu0
  %v1128 = vadd.f32 0.0, %v1127
  %1129 = vmatmul.f32.gmra.mxu0 %v444
  %v1130 = vpop.f32.mrf.mxu0
  %v1131 = vadd.f32 0.0, %v1130
  %1132 = vdwg.mxu0
  %1133 = vmatpush.msra.mxu0 0.0
  %1134 = vmatpush.msra.mxu0 0.0
  %1135 = vmatpush.msra.mxu0 0.0
  %1136 = vmatpush.msra.mxu0 0.0
  %1137 = vmatpush.msra.mxu0 %v777
  %1138 = vmatpush.msra.mxu0 %v765
  %1139 = vmatpush.msra.mxu0 %v753
  %1140 = vmatpush.msra.mxu0 %v741
  %1141 = vmatpush.msra.mxu0 %v729
  %1142 = vmatpush.msra.mxu0 %v717
  %1143 = vmatpush.msra.mxu0 %v705
  %1144 = vmatpush.msra.mxu0 %v693
  %1145 = vmatpush.msra.mxu0 %v681
  %1146 = vmatpush.msra.mxu0 %v669
  %1147 = vmatpush.msra.mxu0 %v657
  %1148 = vmatpush.msra.mxu0 %v645
  %1149 = vmatmul.f32.gmra.mxu0 %v783
  %v1150 = vpop.f32.mrf.mxu0
  %v1151 = vadd.f32 %v1128, %v1150
  %1152 = vmatmul.f32.gmra.mxu0 %v786
  %v1153 = vpop.f32.mrf.mxu0
  %v1154 = vadd.f32 %v1131, %v1153
  %1155 = vdwg.mxu0
  %1156 = vmatpush.msra.mxu0 %v634
  %1157 = vmatpush.msra.mxu0 %v622
  %1158 = vmatpush.msra.mxu0 %v610
  %1159 = vmatpush.msra.mxu0 %v598
  %1160 = vmatpush.msra.mxu0 %v586
  %1161 = vmatpush.msra.mxu0 %v574
  %1162 = vmatpush.msra.mxu0 %v562
  %1163 = vmatpush.msra.mxu0 %v550
  %1164 = vmatpush.msra.mxu0 %v538
  %1165 = vmatpush.msra.mxu0 %v526
  %1166 = vmatpush.msra.mxu0 %v514
  %1167 = vmatpush.msra.mxu0 %v502
  %1168 = vmatpush.msra.mxu0 %v490
  %1169 = vmatpush.msra.mxu0 %v478
  %1170 = vmatpush.msra.mxu0 %v466
  %1171 = vmatpush.msra.mxu0 %v454
  %1172 = vmatmul.f32.gmra.mxu0 %v442
  %v1173 = vpop.f32.mrf.mxu0
  %v1174 = vadd.f32 0.0, %v1173
  %1175 = vmatmul.f32.gmra.mxu0 %v444
  %v1176 = vpop.f32.mrf.mxu0
  %v1177 = vadd.f32 0.0, %v1176
  %1178 = vdwg.mxu0
  %1179 = vmatpush.msra.mxu0 0.0
  %1180 = vmatpush.msra.mxu0 0.0
  %1181 = vmatpush.msra.mxu0 0.0
  %1182 = vmatpush.msra.mxu0 0.0
  %1183 = vmatpush.msra.mxu0 %v778
  %1184 = vmatpush.msra.mxu0 %v766
  %1185 = vmatpush.msra.mxu0 %v754
  %1186 = vmatpush.msra.mxu0 %v742
  %1187 = vmatpush.msra.mxu0 %v730
  %1188 = vmatpush.msra.mxu0 %v718
  %1189 = vmatpush.msra.mxu0 %v706
  %1190 = vmatpush.msra.mxu0 %v694
  %1191 = vmatpush.msra.mxu0 %v682
  %1192 = vmatpush.msra.mxu0 %v670
  %1193 = vmatpush.msra.mxu0 %v658
  %1194 = vmatpush.msra.mxu0 %v646
  %1195 = vmatmul.f32.gmra.mxu0 %v783
  %v1196 = vpop.f32.mrf.mxu0
  %v1197 = vadd.f32 %v1174, %v1196
  %1198 = vmatmul.f32.gmra.mxu0 %v786
  %v1199 = vpop.f32.mrf.mxu0
  %v1200 = vadd.f32 %v1177, %v1199
  %1201 = vdwg.mxu0
  %1202 = vmatpush.msra.mxu0 %v635
  %1203 = vmatpush.msra.mxu0 %v623
  %1204 = vmatpush.msra.mxu0 %v611
  %1205 = vmatpush.msra.mxu0 %v599
  %1206 = vmatpush.msra.mxu0 %v587
  %1207 = vmatpush.msra.mxu0 %v575
  %1208 = vmatpush.msra.mxu0 %v563
  %1209 = vmatpush.msra.mxu0 %v551
  %1210 = vmatpush.msra.mxu0 %v539
  %1211 = vmatpush.msra.mxu0 %v527
  %1212 = vmatpush.msra.mxu0 %v515
  %1213 = vmatpush.msra.mxu0 %v503
  %1214 = vmatpush.msra.mxu0 %v491
  %1215 = vmatpush.msra.mxu0 %v479
  %1216 = vmatpush.msra.mxu0 %v467
  %1217 = vmatpush.msra.mxu0 %v455
  %1218 = vmatmul.f32.gmra.mxu0 %v442
  %v1219 = vpop.f32.mrf.mxu0
  %v1220 = vadd.f32 0.0, %v1219
  %1221 = vmatmul.f32.gmra.mxu0 %v444
  %v1222 = vpop.f32.mrf.mxu0
  %v1223 = vadd.f32 0.0, %v1222
  %1224 = vdwg.mxu0
  %1225 = vmatpush.msra.mxu0 0.0
  %1226 = vmatpush.msra.mxu0 0.0
  %1227 = vmatpush.msra.mxu0 0.0
  %1228 = vmatpush.msra.mxu0 0.0
  %1229 = vmatpush.msra.mxu0 %v779
  %1230 = vmatpush.msra.mxu0 %v767
  %1231 = vmatpush.msra.mxu0 %v755
  %1232 = vmatpush.msra.mxu0 %v743
  %1233 = vmatpush.msra.mxu0 %v731
  %1234 = vmatpush.msra.mxu0 %v719
  %1235 = vmatpush.msra.mxu0 %v707
  %1236 = vmatpush.msra.mxu0 %v695
  %1237 = vmatpush.msra.mxu0 %v683
  %1238 = vmatpush.msra.mxu0 %v671
  %1239 = vmatpush.msra.mxu0 %v659
  %1240 = vmatpush.msra.mxu0 %v647
  %1241 = vmatmul.f32.gmra.mxu0 %v783
  %v1242 = vpop.f32.mrf.mxu0
  %v1243 = vadd.f32 %v1220, %v1242
  %1244 = vmatmul.f32.gmra.mxu0 %v786
  %v1245 = vpop.f32.mrf.mxu0
  %v1246 = vadd.f32 %v1223, %v1245
  %1247 = vdwg.mxu0
  %1248 = vmatpush.msra.mxu0 %v636
  %1249 = vmatpush.msra.mxu0 %v624
  %1250 = vmatpush.msra.mxu0 %v612
  %1251 = vmatpush.msra.mxu0 %v600
  %1252 = vmatpush.msra.mxu0 %v588
  %1253 = vmatpush.msra.mxu0 %v576
  %1254 = vmatpush.msra.mxu0 %v564
  %1255 = vmatpush.msra.mxu0 %v552
  %1256 = vmatpush.msra.mxu0 %v540
  %1257 = vmatpush.msra.mxu0 %v528
  %1258 = vmatpush.msra.mxu0 %v516
  %1259 = vmatpush.msra.mxu0 %v504
  %1260 = vmatpush.msra.mxu0 %v492
  %1261 = vmatpush.msra.mxu0 %v480
  %1262 = vmatpush.msra.mxu0 %v468
  %1263 = vmatpush.msra.mxu0 %v456
  %1264 = vmatmul.f32.gmra.mxu0 %v442
  %v1265 = vpop.f32.mrf.mxu0
  %v1266 = vadd.f32 0.0, %v1265
  %1267 = vmatmul.f32.gmra.mxu0 %v444
  %v1268 = vpop.f32.mrf.mxu0
  %v1269 = vadd.f32 0.0, %v1268
  %1270 = vdwg.mxu0
  %1271 = vmatpush.msra.mxu0 0.0
  %1272 = vmatpush.msra.mxu0 0.0
  %1273 = vmatpush.msra.mxu0 0.0
  %1274 = vmatpush.msra.mxu0 0.0
  %1275 = vmatpush.msra.mxu0 %v780
  %1276 = vmatpush.msra.mxu0 %v768
  %1277 = vmatpush.msra.mxu0 %v756
  %1278 = vmatpush.msra.mxu0 %v744
  %1279 = vmatpush.msra.mxu0 %v732
  %1280 = vmatpush.msra.mxu0 %v720
  %1281 = vmatpush.msra.mxu0 %v708
  %1282 = vmatpush.msra.mxu0 %v696
  %1283 = vmatpush.msra.mxu0 %v684
  %1284 = vmatpush.msra.mxu0 %v672
  %1285 = vmatpush.msra.mxu0 %v660
  %1286 = vmatpush.msra.mxu0 %v648
  %1287 = vmatmul.f32.gmra.mxu0 %v783
  %v1288 = vpop.f32.mrf.mxu0
  %v1289 = vadd.f32 %v1266, %v1288
  %1290 = vmatmul.f32.gmra.mxu0 %v786
  %v1291 = vpop.f32.mrf.mxu0
  %v1292 = vadd.f32 %v1269, %v1291
  %1293 = vdwg.mxu0
  %1294 = vmatpush.msra.mxu0 %v637
  %1295 = vmatpush.msra.mxu0 %v625
  %1296 = vmatpush.msra.mxu0 %v613
  %1297 = vmatpush.msra.mxu0 %v601
  %1298 = vmatpush.msra.mxu0 %v589
  %1299 = vmatpush.msra.mxu0 %v577
  %1300 = vmatpush.msra.mxu0 %v565
  %1301 = vmatpush.msra.mxu0 %v553
  %1302 = vmatpush.msra.mxu0 %v541
  %1303 = vmatpush.msra.mxu0 %v529
  %1304 = vmatpush.msra.mxu0 %v517
  %1305 = vmatpush.msra.mxu0 %v505
  %1306 = vmatpush.msra.mxu0 %v493
  %1307 = vmatpush.msra.mxu0 %v481
  %1308 = vmatpush.msra.mxu0 %v469
  %1309 = vmatpush.msra.mxu0 %v457
  %1310 = vmatmul.f32.gmra.mxu0 %v442
  %v1311 = vpop.f32.mrf.mxu0
  %v1312 = vadd.f32 0.0, %v1311
  %1313 = vmatmul.f32.gmra.mxu0 %v444
  %v1314 = vpop.f32.mrf.mxu0
  %v1315 = vadd.f32 0.0, %v1314
  %1316 = vdwg.mxu0
  %1317 = vmatpush.msra.mxu0 0.0
  %1318 = vmatpush.msra.mxu0 0.0
  %1319 = vmatpush.msra.mxu0 0.0
  %1320 = vmatpush.msra.mxu0 0.0
  %1321 = vmatpush.msra.mxu0 %v781
  %1322 = vmatpush.msra.mxu0 %v769
  %1323 = vmatpush.msra.mxu0 %v757
  %1324 = vmatpush.msra.mxu0 %v745
  %1325 = vmatpush.msra.mxu0 %v733
  %1326 = vmatpush.msra.mxu0 %v721
  %1327 = vmatpush.msra.mxu0 %v709
  %1328 = vmatpush.msra.mxu0 %v697
  %1329 = vmatpush.msra.mxu0 %v685
  %1330 = vmatpush.msra.mxu0 %v673
  %1331 = vmatpush.msra.mxu0 %v661
  %1332 = vmatpush.msra.mxu0 %v649
  %1333 = vmatmul.f32.gmra.mxu0 %v783
  %v1334 = vpop.f32.mrf.mxu0
  %v1335 = vadd.f32 %v1312, %v1334
  %1336 = vmatmul.f32.gmra.mxu0 %v786
  %v1337 = vpop.f32.mrf.mxu0
  %v1338 = vadd.f32 %v1315, %v1337
  %1339 = vdwg.mxu0
  %v1348 = vrot.slane %v1013, 7
  %v1349 = vrot.slane %v1059, 7
  %v1350 = vrot.slane %v1105, 7
  %v1351 = vrot.slane %v1151, 7
  %v1352 = vrot.slane %v1016, 7
  %v1353 = vsel %vm236, %v1348, %v1352
  %v1354 = vrot.slane %v1062, 7
  %v1355 = vsel %vm236, %v1349, %v1354
  %v1356 = vrot.slane %v1108, 7
  %v1357 = vsel %vm236, %v1350, %v1356
  %v1358 = vrot.slane %v1154, 7
  %v1359 = vsel %vm236, %v1351, %v1358
  %v1368 = vsel %vm236, 0.0, %v1348
  %v1369 = vsel %vm236, 0.0, %v1349
  %v1370 = vsel %vm236, 0.0, %v1350
  %v1371 = vsel %vm236, 0.0, %v1351
  %v1372 = vmul.f32 %v1368, %v116
  %v1373 = vmul.f32 %v1369, %v116
  %v1374 = vmul.f32 %v1370, %v116
  %v1375 = vmul.f32 %v1371, %v116
  %v1376 = vmul.f32 %v1353, %v117
  %v1377 = vmul.f32 %v1355, %v117
  %v1378 = vmul.f32 %v1357, %v117
  %v1379 = vmul.f32 %v1359, %v117
  %v1380 = vadd.f32 %v829, %v1372
  %v1381 = vadd.f32 %v875, %v1373
  %v1382 = vadd.f32 %v921, %v1374
  %v1383 = vadd.f32 %v967, %v1375
  %v1384 = vadd.f32 %v832, %v1376
  %v1385 = vadd.f32 %v878, %v1377
  %v1386 = vadd.f32 %v924, %v1378
  %v1387 = vadd.f32 %v970, %v1379
  %vm1396 = vcmask 1046528
  %v1397 = vrot.slane %v1197, 1
  %v1398 = vrot.slane %v1200, 1
  %v1399 = vsel %vm1396, %v1397, %v1398
  %v1400 = vrot.slane %v1243, 1
  %v1401 = vrot.slane %v1246, 1
  %v1402 = vsel %vm1396, %v1400, %v1401
  %v1403 = vrot.slane %v1289, 1
  %v1404 = vrot.slane %v1292, 1
  %v1405 = vsel %vm1396, %v1403, %v1404
  %v1406 = vrot.slane %v1335, 1
  %v1407 = vrot.slane %v1338, 1
  %v1408 = vsel %vm1396, %v1406, %v1407
  %vm1417 = vcmask 1044480
  %v1418 = vsel %vm1417, %v1398, 0.0
  %v1419 = vsel %vm1417, %v1401, 0.0
  %v1420 = vsel %vm1417, %v1404, 0.0
  %v1421 = vsel %vm1417, %v1407, 0.0
  %v1422 = vmul.f32 %v1399, %v122
  %v1423 = vmul.f32 %v1402, %v122
  %v1424 = vmul.f32 %v1405, %v122
  %v1425 = vmul.f32 %v1408, %v122
  %v1426 = vmul.f32 %v1418, %v123
  %v1427 = vmul.f32 %v1419, %v123
  %v1428 = vmul.f32 %v1420, %v123
  %v1429 = vmul.f32 %v1421, %v123
  %v1430 = vadd.f32 %v1380, %v1422
  %v1431 = vadd.f32 %v1381, %v1423
  %v1432 = vadd.f32 %v1382, %v1424
  %v1433 = vadd.f32 %v1383, %v1425
  %v1434 = vadd.f32 %v1384, %v1426
  %v1435 = vadd.f32 %v1385, %v1427
  %v1436 = vadd.f32 %v1386, %v1428
  %v1437 = vadd.f32 %v1387, %v1429
  %v1438 = vld [vmem:[%s7] sm:$0xf]
  %v1440 = vperm.slane %v1438, 0
  %v1441 = vperm.slane %v1438, 1
  %v1442 = vperm.slane %v1438, 2
  %v1443 = vperm.slane %v1438, 3
  %v1448 = vadd.f32 %v1430, %v1440
  %v1449 = vadd.f32 %v1431, %v1441
  %v1450 = vadd.f32 %v1432, %v1442
  %v1451 = vadd.f32 %v1433, %v1443
  %v1452 = vadd.f32 %v1434, %v1440
  %v1453 = vadd.f32 %v1435, %v1441
  %v1454 = vadd.f32 %v1436, %v1442
  %v1455 = vadd.f32 %v1437, %v1443
  %v1456 = vmax.f32 %v1448, 0.0
  %v1457 = vmax.f32 %v1449, 0.0
  %v1458 = vmax.f32 %v1450, 0.0
  %v1459 = vmax.f32 %v1451, 0.0
  %v1460 = vmax.f32 %v1452, 0.0
  %v1461 = vmax.f32 %v1453, 0.0
  %v1462 = vmax.f32 %v1454, 0.0
  %v1463 = vmax.f32 %v1455, 0.0
  %v1464 = vld [vmem:[%s8] sm:$0xff]
  %v1465 = vld [vmem:[%s8 + $0x8] sm:$0xff]
  %v1466 = vld [vmem:[%s8 + $0x10] sm:$0xff]
  %v1467 = vld [vmem:[%s8 + $0x18] sm:$0xff]
  %v1468 = vld [vmem:[%s8 + $0x20] sm:$0xff]
  %v1469 = vld [vmem:[%s8 + $0x28] sm:$0xff]
  %v1470 = vld [vmem:[%s8 + $0x30] sm:$0xff]
  %v1471 = vld [vmem:[%s8 + $0x38] sm:$0xff]
  %v1472 = vld [vmem:[%s8 + $0x40] sm:$0xff]
  %v1473 = vld [vmem:[%s8 + $0x48] sm:$0xff]
  %v1474 = vld [vmem:[%s8 + $0x50] sm:$0xff]
  %v1475 = vld [vmem:[%s8 + $0x58] sm:$0xff]
  %v1476 = vld [vmem:[%s8 + $0x60] sm:$0xff]
  %v1477 = vld [vmem:[%s8 + $0x68] sm:$0xff]
  %v1478 = vld [vmem:[%s8 + $0x70] sm:$0xff]
  %v1479 = vld [vmem:[%s8 + $0x78] sm:$0xff]
  %v1480 = vld [vmem:[%s8 + $0x80] sm:$0xff]
  %v1481 = vld [vmem:[%s8 + $0x88] sm:$0xff]
  %v1482 = vld [vmem:[%s8 + $0x90] sm:$0xff]
  %v1483 = vld [vmem:[%s8 + $0x98] sm:$0xff]
  %v1484 = vld [vmem:[%s8 + $0xa0] sm:$0xff]
  %v1485 = vld [vmem:[%s8 + $0xa8] sm:$0xff]
  %v1486 = vld [vmem:[%s8 + $0xb0] sm:$0xff]
  %v1487 = vld [vmem:[%s8 + $0xb8] sm:$0xff]
  %v1488 = vld [vmem:[%s8 + $0xc0] sm:$0xff]
  %v1489 = vld [vmem:[%s8 + $0xc8] sm:$0xff]
  %v1490 = vld [vmem:[%s8 + $0xd0] sm:$0xff]
  %v1491 = vld [vmem:[%s8 + $0xd8] sm:$0xff]
  %v1492 = vld [vmem:[%s8 + $0xe0] sm:$0xff]
  %v1493 = vld [vmem:[%s8 + $0xe8] sm:$0xff]
  %v1494 = vld [vmem:[%s8 + $0xf0] sm:$0xff]
  %v1495 = vld [vmem:[%s8 + $0xf8] sm:$0xff]
  %v1496 = vld [vmem:[%s8 + $0x100] sm:$0xff]
  %v1497 = vld [vmem:[%s8 + $0x108] sm:$0xff]
  %v1498 = vld [vmem:[%s8 + $0x110] sm:$0xff]
  %v1499 = vld [vmem:[%s8 + $0x118] sm:$0xff]
  %v1500 = vld [vmem:[%s8 + $0x120] sm:$0xff]
  %v1501 = vld [vmem:[%s8 + $0x128] sm:$0xff]
  %v1502 = vld [vmem:[%s8 + $0x130] sm:$0xff]
  %v1503 = vld [vmem:[%s8 + $0x138] sm:$0xff]
  %v1504 = vld [vmem:[%s8 + $0x140] sm:$0xff]
  %v1505 = vld [vmem:[%s8 + $0x148] sm:$0xff]
  %v1506 = vld [vmem:[%s8 + $0x150] sm:$0xff]
  %v1507 = vld [vmem:[%s8 + $0x158] sm:$0xff]
  %v1508 = vld [vmem:[%s8 + $0x160] sm:$0xff]
  %v1509 = vld [vmem:[%s8 + $0x168] sm:$0xff]
  %v1510 = vld [vmem:[%s8 + $0x170] sm:$0xff]
  %v1511 = vld [vmem:[%s8 + $0x178] sm:$0xff]
  %v1512 = vld [vmem:[%s8 + $0x180] sm:$0xff]
  %v1513 = vld [vmem:[%s8 + $0x188] sm:$0xff]
  %v1514 = vld [vmem:[%s8 + $0x190] sm:$0xff]
  %v1515 = vld [vmem:[%s8 + $0x198] sm:$0xff]
  %v1516 = vld [vmem:[%s8 + $0x1a0] sm:$0xff]
  %v1517 = vld [vmem:[%s8 + $0x1a8] sm:$0xff]
  %v1518 = vld [vmem:[%s8 + $0x1b0] sm:$0xff]
  %v1519 = vld [vmem:[%s8 + $0x1b8] sm:$0xff]
  %v1520 = vld [vmem:[%s8 + $0x1c0] sm:$0xff]
  %v1521 = vld [vmem:[%s8 + $0x1c8] sm:$0xff]
  %v1522 = vld [vmem:[%s8 + $0x1d0] sm:$0xff]
  %v1523 = vld [vmem:[%s8 + $0x1d8] sm:$0xff]
  %v1524 = vld [vmem:[%s8 + $0x1e0] sm:$0xff]
  %v1525 = vld [vmem:[%s8 + $0x1e8] sm:$0xff]
  %v1526 = vld [vmem:[%s8 + $0x1f0] sm:$0xff]
  %v1527 = vld [vmem:[%s8 + $0x1f8] sm:$0xff]
  %v1528 = vld [vmem:[%s8 + $0x200] sm:$0xff]
  %v1529 = vld [vmem:[%s8 + $0x208] sm:$0xff]
  %v1530 = vld [vmem:[%s8 + $0x210] sm:$0xff]
  %v1531 = vld [vmem:[%s8 + $0x218] sm:$0xff]
  %v1532 = vld [vmem:[%s8 + $0x220] sm:$0xff]
  %v1533 = vld [vmem:[%s8 + $0x228] sm:$0xff]
  %v1534 = vld [vmem:[%s8 + $0x230] sm:$0xff]
  %v1535 = vld [vmem:[%s8 + $0x238] sm:$0xff]
  %v1536 = vld [vmem:[%s8 + $0x240] sm:$0xff]
  %v1537 = vld [vmem:[%s8 + $0x248] sm:$0xff]
  %v1538 = vld [vmem:[%s8 + $0x250] sm:$0xff]
  %v1539 = vld [vmem:[%s8 + $0x258] sm:$0xff]
  %v1540 = vld [vmem:[%s8 + $0x260] sm:$0xff]
  %v1541 = vld [vmem:[%s8 + $0x268] sm:$0xff]
  %v1542 = vld [vmem:[%s8 + $0x270] sm:$0xff]
  %v1543 = vld [vmem:[%s8 + $0x278] sm:$0xff]
  %v1544 = vld [vmem:[%s8 + $0x280] sm:$0xff]
  %v1545 = vld [vmem:[%s8 + $0x288] sm:$0xff]
  %v1546 = vld [vmem:[%s8 + $0x290] sm:$0xff]
  %v1547 = vld [vmem:[%s8 + $0x298] sm:$0xff]
  %v1548 = vld [vmem:[%s8 + $0x2a0] sm:$0xff]
  %v1549 = vld [vmem:[%s8 + $0x2a8] sm:$0xff]
  %v1550 = vld [vmem:[%s8 + $0x2b0] sm:$0xff]
  %v1551 = vld [vmem:[%s8 + $0x2b8] sm:$0xff]
  %v1552 = vld [vmem:[%s8 + $0x2c0] sm:$0xff]
  %v1553 = vld [vmem:[%s8 + $0x2c8] sm:$0xff]
  %v1554 = vld [vmem:[%s8 + $0x2d0] sm:$0xff]
  %v1555 = vld [vmem:[%s8 + $0x2d8] sm:$0xff]
  %v1556 = vld [vmem:[%s8 + $0x2e0] sm:$0xff]
  %v1557 = vld [vmem:[%s8 + $0x2e8] sm:$0xff]
  %v1558 = vld [vmem:[%s8 + $0x2f0] sm:$0xff]
  %v1559 = vld [vmem:[%s8 + $0x2f8] sm:$0xff]
  %v1560 = vld [vmem:[%s8 + $0x300] sm:$0xff]
  %v1561 = vld [vmem:[%s8 + $0x308] sm:$0xff]
  %v1562 = vld [vmem:[%s8 + $0x310] sm:$0xff]
  %v1563 = vld [vmem:[%s8 + $0x318] sm:$0xff]
  %v1564 = vld [vmem:[%s8 + $0x320] sm:$0xff]
  %v1565 = vld [vmem:[%s8 + $0x328] sm:$0xff]
  %v1566 = vld [vmem:[%s8 + $0x330] sm:$0xff]
  %v1567 = vld [vmem:[%s8 + $0x338] sm:$0xff]
  %v1568 = vld [vmem:[%s8 + $0x340] sm:$0xff]
  %v1569 = vld [vmem:[%s8 + $0x348] sm:$0xff]
  %v1570 = vld [vmem:[%s8 + $0x350] sm:$0xff]
  %v1571 = vld [vmem:[%s8 + $0x358] sm:$0xff]
  %v1572 = vld [vmem:[%s8 + $0x360] sm:$0xff]
  %v1573 = vld [vmem:[%s8 + $0x368] sm:$0xff]
  %v1574 = vld [vmem:[%s8 + $0x370] sm:$0xff]
  %v1575 = vld [vmem:[%s8 + $0x378] sm:$0xff]
  %v1576 = vld [vmem:[%s8 + $0x380] sm:$0xff]
  %v1577 = vld [vmem:[%s8 + $0x388] sm:$0xff]
  %v1578 = vld [vmem:[%s8 + $0x390] sm:$0xff]
  %v1579 = vld [vmem:[%s8 + $0x398] sm:$0xff]
  %v1580 = vld [vmem:[%s8 + $0x3a0] sm:$0xff]
  %v1581 = vld [vmem:[%s8 + $0x3a8] sm:$0xff]
  %v1582 = vld [vmem:[%s8 + $0x3b0] sm:$0xff]
  %v1583 = vld [vmem:[%s8 + $0x3b8] sm:$0xff]
  %v1584 = vld [vmem:[%s8 + $0x3c0] sm:$0xff]
  %v1585 = vld [vmem:[%s8 + $0x3c8] sm:$0xff]
  %v1586 = vld [vmem:[%s8 + $0x3d0] sm:$0xff]
  %v1587 = vld [vmem:[%s8 + $0x3d8] sm:$0xff]
  %v1588 = vld [vmem:[%s8 + $0x3e0] sm:$0xff]
  %v1589 = vld [vmem:[%s8 + $0x3e8] sm:$0xff]
  %v1590 = vld [vmem:[%s8 + $0x3f0] sm:$0xff]
  %v1591 = vld [vmem:[%s8 + $0x3f8] sm:$0xff]
  %v1592 = vld [vmem:[%s8 + $0x400] sm:$0xff]
  %v1593 = vld [vmem:[%s8 + $0x408] sm:$0xff]
  %v1594 = vld [vmem:[%s8 + $0x410] sm:$0xff]
  %v1595 = vld [vmem:[%s8 + $0x418] sm:$0xff]
  %v1596 = vld [vmem:[%s8 + $0x420] sm:$0xff]
  %v1597 = vld [vmem:[%s8 + $0x428] sm:$0xff]
  %v1598 = vld [vmem:[%s8 + $0x430] sm:$0xff]
  %v1599 = vld [vmem:[%s8 + $0x438] sm:$0xff]
  %v1600 = vld [vmem:[%s8 + $0x440] sm:$0xff]
  %v1601 = vld [vmem:[%s8 + $0x448] sm:$0xff]
  %v1602 = vld [vmem:[%s8 + $0x450] sm:$0xff]
  %v1603 = vld [vmem:[%s8 + $0x458] sm:$0xff]
  %v1604 = vld [vmem:[%s8 + $0x460] sm:$0xff]
  %v1605 = vld [vmem:[%s8 + $0x468] sm:$0xff]
  %v1606 = vld [vmem:[%s8 + $0x470] sm:$0xff]
  %v1607 = vld [vmem:[%s8 + $0x478] sm:$0xff]
  %v1608 = vld [vmem:[%s8 + $0x480] sm:$0xff]
  %v1609 = vld [vmem:[%s8 + $0x488] sm:$0xff]
  %v1610 = vld [vmem:[%s8 + $0x490] sm:$0xff]
  %v1611 = vld [vmem:[%s8 + $0x498] sm:$0xff]
  %v1612 = vld [vmem:[%s8 + $0x4a0] sm:$0xff]
  %v1613 = vld [vmem:[%s8 + $0x4a8] sm:$0xff]
  %v1614 = vld [vmem:[%s8 + $0x4b0] sm:$0xff]
  %v1615 = vld [vmem:[%s8 + $0x4b8] sm:$0xff]
  %v1616 = vld [vmem:[%s8 + $0x4c0] sm:$0xff]
  %v1617 = vld [vmem:[%s8 + $0x4c8] sm:$0xff]
  %v1618 = vld [vmem:[%s8 + $0x4d0] sm:$0xff]
  %v1619 = vld [vmem:[%s8 + $0x4d8] sm:$0xff]
  %v1620 = vld [vmem:[%s8 + $0x4e0] sm:$0xff]
  %v1621 = vld [vmem:[%s8 + $0x4e8] sm:$0xff]
  %v1622 = vld [vmem:[%s8 + $0x4f0] sm:$0xff]
  %v1623 = vld [vmem:[%s8 + $0x4f8] sm:$0xff]
  %v1624 = vld [vmem:[%s8 + $0x500] sm:$0xff]
  %v1625 = vld [vmem:[%s8 + $0x508] sm:$0xff]
  %v1626 = vld [vmem:[%s8 + $0x510] sm:$0xff]
  %v1627 = vld [vmem:[%s8 + $0x518] sm:$0xff]
  %v1628 = vld [vmem:[%s8 + $0x520] sm:$0xff]
  %v1629 = vld [vmem:[%s8 + $0x528] sm:$0xff]
  %v1630 = vld [vmem:[%s8 + $0x530] sm:$0xff]
  %v1631 = vld [vmem:[%s8 + $0x538] sm:$0xff]
  %v1632 = vld [vmem:[%s8 + $0x540] sm:$0xff]
  %v1633 = vld [vmem:[%s8 + $0x548] sm:$0xff]
  %v1634 = vld [vmem:[%s8 + $0x550] sm:$0xff]
  %v1635 = vld [vmem:[%s8 + $0x558] sm:$0xff]
  %v1636 = vld [vmem:[%s8 + $0x560] sm:$0xff]
  %v1637 = vld [vmem:[%s8 + $0x568] sm:$0xff]
  %v1638 = vld [vmem:[%s8 + $0x570] sm:$0xff]
  %v1639 = vld [vmem:[%s8 + $0x578] sm:$0xff]
  %v1640 = vld [vmem:[%s8 + $0x580] sm:$0xff]
  %v1641 = vld [vmem:[%s8 + $0x588] sm:$0xff]
  %v1642 = vld [vmem:[%s8 + $0x590] sm:$0xff]
  %v1643 = vld [vmem:[%s8 + $0x598] sm:$0xff]
  %v1644 = vld [vmem:[%s8 + $0x5a0] sm:$0xff]
  %v1645 = vld [vmem:[%s8 + $0x5a8] sm:$0xff]
  %v1646 = vld [vmem:[%s8 + $0x5b0] sm:$0xff]
  %v1647 = vld [vmem:[%s8 + $0x5b8] sm:$0xff]
  %v1648 = vld [vmem:[%s8 + $0x5c0] sm:$0xff]
  %v1649 = vld [vmem:[%s8 + $0x5c8] sm:$0xff]
  %v1650 = vld [vmem:[%s8 + $0x5d0] sm:$0xff]
  %v1651 = vld [vmem:[%s8 + $0x5d8] sm:$0xff]
  %v1652 = vld [vmem:[%s8 + $0x5e0] sm:$0xff]
  %v1653 = vld [vmem:[%s8 + $0x5e8] sm:$0xff]
  %v1654 = vld [vmem:[%s8 + $0x5f0] sm:$0xff]
  %v1655 = vld [vmem:[%s8 + $0x5f8] sm:$0xff]
  %1656 = vmatpush.msra.mxu0 %v1509
  %1657 = vmatpush.msra.mxu0 %v1506
  %1658 = vmatpush.msra.mxu0 %v1503
  %1659 = vmatpush.msra.mxu0 %v1500
  %1660 = vmatpush.msra.mxu0 %v1497
  %1661 = vmatpush.msra.mxu0 %v1494
  %1662 = vmatpush.msra.mxu0 %v1491
  %1663 = vmatpush.msra.mxu0 %v1488
  %1664 = vmatpush.msra.mxu0 %v1485
  %1665 = vmatpush.msra.mxu0 %v1482
  %1666 = vmatpush.msra.mxu0 %v1479
  %1667 = vmatpush.msra.mxu0 %v1476
  %1668 = vmatpush.msra.mxu0 %v1473
  %1669 = vmatpush.msra.mxu0 %v1470
  %1670 = vmatpush.msra.mxu0 %v1467
  %1671 = vmatpush.msra.mxu0 %v1464
  %1672 = vmatmul.f32.gmra.mxu0 %v1456
  %v1673 = vpop.f32.mrf.mxu0
  %v1674 = vadd.f32 0.0, %v1673
  %1675 = vmatmul.f32.gmra.mxu0 %v1460
  %v1676 = vpop.f32.mrf.mxu0
  %v1677 = vadd.f32 0.0, %v1676
  %1678 = vdwg.mxu0
  %1679 = vmatpush.msra.mxu0 %v1557
  %1680 = vmatpush.msra.mxu0 %v1554
  %1681 = vmatpush.msra.mxu0 %v1551
  %1682 = vmatpush.msra.mxu0 %v1548
  %1683 = vmatpush.msra.mxu0 %v1545
  %1684 = vmatpush.msra.mxu0 %v1542
  %1685 = vmatpush.msra.mxu0 %v1539
  %1686 = vmatpush.msra.mxu0 %v1536
  %1687 = vmatpush.msra.mxu0 %v1533
  %1688 = vmatpush.msra.mxu0 %v1530
  %1689 = vmatpush.msra.mxu0 %v1527
  %1690 = vmatpush.msra.mxu0 %v1524
  %1691 = vmatpush.msra.mxu0 %v1521
  %1692 = vmatpush.msra.mxu0 %v1518
  %1693 = vmatpush.msra.mxu0 %v1515
  %1694 = vmatpush.msra.mxu0 %v1512
  %1695 = vmatmul.f32.gmra.mxu0 %v1457
  %v1696 = vpop.f32.mrf.mxu0
  %v1697 = vadd.f32 %v1674, %v1696
  %1698 = vmatmul.f32.gmra.mxu0 %v1461
  %v1699 = vpop.f32.mrf.mxu0
  %v1700 = vadd.f32 %v1677, %v1699
  %1701 = vdwg.mxu0
  %1702 = vmatpush.msra.mxu0 %v1605
  %1703 = vmatpush.msra.mxu0 %v1602
  %1704 = vmatpush.msra.mxu0 %v1599
  %1705 = vmatpush.msra.mxu0 %v1596
  %1706 = vmatpush.msra.mxu0 %v1593
  %1707 = vmatpush.msra.mxu0 %v1590
  %1708 = vmatpush.msra.mxu0 %v1587
  %1709 = vmatpush.msra.mxu0 %v1584
  %1710 = vmatpush.msra.mxu0 %v1581
  %1711 = vmatpush.msra.mxu0 %v1578
  %1712 = vmatpush.msra.mxu0 %v1575
  %1713 = vmatpush.msra.mxu0 %v1572
  %1714 = vmatpush.msra.mxu0 %v1569
  %1715 = vmatpush.msra.mxu0 %v1566
  %1716 = vmatpush.msra.mxu0 %v1563
  %1717 = vmatpush.msra.mxu0 %v1560
  %1718 = vmatmul.f32.gmra.mxu0 %v1458
  %v1719 = vpop.f32.mrf.mxu0
  %v1720 = vadd.f32 %v1697, %v1719
  %1721 = vmatmul.f32.gmra.mxu0 %v1462
  %v1722 = vpop.f32.mrf.mxu0
  %v1723 = vadd.f32 %v1700, %v1722
  %1724 = vdwg.mxu0
  %1725 = vmatpush.msra.mxu0 %v1653
  %1726 = vmatpush.msra.mxu0 %v1650
  %1727 = vmatpush.msra.mxu0 %v1647
  %1728 = vmatpush.msra.mxu0 %v1644
  %1729 = vmatpush.msra.mxu0 %v1641
  %1730 = vmatpush.msra.mxu0 %v1638
  %1731 = vmatpush.msra.mxu0 %v1635
  %1732 = vmatpush.msra.mxu0 %v1632
  %1733 = vmatpush.msra.mxu0 %v1629
  %1734 = vmatpush.msra.mxu0 %v1626
  %1735 = vmatpush.msra.mxu0 %v1623
  %1736 = vmatpush.msra.mxu0 %v1620
  %1737 = vmatpush.msra.mxu0 %v1617
  %1738 = vmatpush.msra.mxu0 %v1614
  %1739 = vmatpush.msra.mxu0 %v1611
  %1740 = vmatpush.msra.mxu0 %v1608
  %1741 = vmatmul.f32.gmra.mxu0 %v1459
  %v1742 = vpop.f32.mrf.mxu0
  %v1743 = vadd.f32 %v1720, %v1742
  %1744 = vmatmul.f32.gmra.mxu0 %v1463
  %v1745 = vpop.f32.mrf.mxu0
  %v1746 = vadd.f32 %v1723, %v1745
  %1747 = vdwg.mxu0
  %1748 = vmatpush.msra.mxu0 %v1510
  %1749 = vmatpush.msra.mxu0 %v1507
  %1750 = vmatpush.msra.mxu0 %v1504
  %1751 = vmatpush.msra.mxu0 %v1501
  %1752 = vmatpush.msra.mxu0 %v1498
  %1753 = vmatpush.msra.mxu0 %v1495
  %1754 = vmatpush.msra.mxu0 %v1492
  %1755 = vmatpush.msra.mxu0 %v1489
  %1756 = vmatpush.msra.mxu0 %v1486
  %1757 = vmatpush.msra.mxu0 %v1483
  %1758 = vmatpush.msra.mxu0 %v1480
  %1759 = vmatpush.msra.mxu0 %v1477
  %1760 = vmatpush.msra.mxu0 %v1474
  %1761 = vmatpush.msra.mxu0 %v1471
  %1762 = vmatpush.msra.mxu0 %v1468
  %1763 = vmatpush.msra.mxu0 %v1465
  %1764 = vmatmul.f32.gmra.mxu0 %v1456
  %v1765 = vpop.f32.mrf.mxu0
  %v1766 = vadd.f32 0.0, %v1765
  %1767 = vmatmul.f32.gmra.mxu0 %v1460
  %v1768 = vpop.f32.mrf.mxu0
  %v1769 = vadd.f32 0.0, %v1768
  %1770 = vdwg.mxu0
  %1771 = vmatpush.msra.mxu0 %v1558
  %1772 = vmatpush.msra.mxu0 %v1555
  %1773 = vmatpush.msra.mxu0 %v1552
  %1774 = vmatpush.msra.mxu0 %v1549
  %1775 = vmatpush.msra.mxu0 %v1546
  %1776 = vmatpush.msra.mxu0 %v1543
  %1777 = vmatpush.msra.mxu0 %v1540
  %1778 = vmatpush.msra.mxu0 %v1537
  %1779 = vmatpush.msra.mxu0 %v1534
  %1780 = vmatpush.msra.mxu0 %v1531
  %1781 = vmatpush.msra.mxu0 %v1528
  %1782 = vmatpush.msra.mxu0 %v1525
  %1783 = vmatpush.msra.mxu0 %v1522
  %1784 = vmatpush.msra.mxu0 %v1519
  %1785 = vmatpush.msra.mxu0 %v1516
  %1786 = vmatpush.msra.mxu0 %v1513
  %1787 = vmatmul.f32.gmra.mxu0 %v1457
  %v1788 = vpop.f32.mrf.mxu0
  %v1789 = vadd.f32 %v1766, %v1788
  %1790 = vmatmul.f32.gmra.mxu0 %v1461
  %v1791 = vpop.f32.mrf.mxu0
  %v1792 = vadd.f32 %v1769, %v1791
  %1793 = vdwg.mxu0
  %1794 = vmatpush.msra.mxu0 %v1606
  %1795 = vmatpush.msra.mxu0 %v1603
  %1796 = vmatpush.msra.mxu0 %v1600
  %1797 = vmatpush.msra.mxu0 %v1597
  %1798 = vmatpush.msra.mxu0 %v1594
  %1799 = vmatpush.msra.mxu0 %v1591
  %1800 = vmatpush.msra.mxu0 %v1588
  %1801 = vmatpush.msra.mxu0 %v1585
  %1802 = vmatpush.msra.mxu0 %v1582
  %1803 = vmatpush.msra.mxu0 %v1579
  %1804 = vmatpush.msra.mxu0 %v1576
  %1805 = vmatpush.msra.mxu0 %v1573
  %1806 = vmatpush.msra.mxu0 %v1570
  %1807 = vmatpush.msra.mxu0 %v1567
  %1808 = vmatpush.msra.mxu0 %v1564
  %1809 = vmatpush.msra.mxu0 %v1561
  %1810 = vmatmul.f32.gmra.mxu0 %v1458
  %v1811 = vpop.f32.mrf.mxu0
  %v1812 = vadd.f32 %v1789, %v1811
  %1813 = vmatmul.f32.gmra.mxu0 %v1462
  %v1814 = vpop.f32.mrf.mxu0
  %v1815 = vadd.f32 %v1792, %v1814
  %1816 = vdwg.mxu0
  %1817 = vmatpush.msra.mxu0 %v1654
  %1818 = vmatpush.msra.mxu0 %v1651
  %1819 = vmatpush.msra.mxu0 %v1648
  %1820 = vmatpush.msra.mxu0 %v1645
  %1821 = vmatpush.msra.mxu0 %v1642
  %1822 = vmatpush.msra.mxu0 %v1639
  %1823 = vmatpush.msra.mxu0 %v1636
  %1824 = vmatpush.msra.mxu0 %v1633
  %1825 = vmatpush.msra.mxu0 %v1630
  %1826 = vmatpush.msra.mxu0 %v1627
  %1827 = vmatpush.msra.mxu0 %v1624
  %1828 = vmatpush.msra.mxu0 %v1621
  %1829 = vmatpush.msra.mxu0 %v1618
  %1830 = vmatpush.msra.mxu0 %v1615
  %1831 = vmatpush.msra.mxu0 %v1612
  %1832 = vmatpush.msra.mxu0 %v1609
  %1833 = vmatmul.f32.gmra.mxu0 %v1459
  %v1834 = vpop.f32.mrf.mxu0
  %v1835 = vadd.f32 %v1812, %v1834
  %1836 = vmatmul.f32.gmra.mxu0 %v1463
  %v1837 = vpop.f32.mrf.mxu0
  %v1838 = vadd.f32 %v1815, %v1837
  %1839 = vdwg.mxu0
  %1840 = vmatpush.msra.mxu0 %v1511
  %1841 = vmatpush.msra.mxu0 %v1508
  %1842 = vmatpush.msra.mxu0 %v1505
  %1843 = vmatpush.msra.mxu0 %v1502
  %1844 = vmatpush.msra.mxu0 %v1499
  %1845 = vmatpush.msra.mxu0 %v1496
  %1846 = vmatpush.msra.mxu0 %v1493
  %1847 = vmatpush.msra.mxu0 %v1490
  %1848 = vmatpush.msra.mxu0 %v1487
  %1849 = vmatpush.msra.mxu0 %v1484
  %1850 = vmatpush.msra.mxu0 %v1481
  %1851 = vmatpush.msra.mxu0 %v1478
  %1852 = vmatpush.msra.mxu0 %v1475
  %1853 = vmatpush.msra.mxu0 %v1472
  %1854 = vmatpush.msra.mxu0 %v1469
  %1855 = vmatpush.msra.mxu0 %v1466
  %1856 = vmatmul.f32.gmra.mxu0 %v1456
  %v1857 = vpop.f32.mrf.mxu0
  %v1858 = vadd.f32 0.0, %v1857
  %1859 = vmatmul.f32.gmra.mxu0 %v1460
  %v1860 = vpop.f32.mrf.mxu0
  %v1861 = vadd.f32 0.0, %v1860
  %1862 = vdwg.mxu0
  %1863 = vmatpush.msra.mxu0 %v1559
  %1864 = vmatpush.msra.mxu0 %v1556
  %1865 = vmatpush.msra.mxu0 %v1553
  %1866 = vmatpush.msra.mxu0 %v1550
  %1867 = vmatpush.msra.mxu0 %v1547
  %1868 = vmatpush.msra.mxu0 %v1544
  %1869 = vmatpush.msra.mxu0 %v1541
  %1870 = vmatpush.msra.mxu0 %v1538
  %1871 = vmatpush.msra.mxu0 %v1535
  %1872 = vmatpush.msra.mxu0 %v1532
  %1873 = vmatpush.msra.mxu0 %v1529
  %1874 = vmatpush.msra.mxu0 %v1526
  %1875 = vmatpush.msra.mxu0 %v1523
  %1876 = vmatpush.msra.mxu0 %v1520
  %1877 = vmatpush.msra.mxu0 %v1517
  %1878 = vmatpush.msra.mxu0 %v1514
  %1879 = vmatmul.f32.gmra.mxu0 %v1457
  %v1880 = vpop.f32.mrf.mxu0
  %v1881 = vadd.f32 %v1858, %v1880
  %1882 = vmatmul.f32.gmra.mxu0 %v1461
  %v1883 = vpop.f32.mrf.mxu0
  %v1884 = vadd.f32 %v1861, %v1883
  %1885 = vdwg.mxu0
  %1886 = vmatpush.msra.mxu0 %v1607
  %1887 = vmatpush.msra.mxu0 %v1604
  %1888 = vmatpush.msra.mxu0 %v1601
  %1889 = vmatpush.msra.mxu0 %v1598
  %1890 = vmatpush.msra.mxu0 %v1595
  %1891 = vmatpush.msra.mxu0 %v1592
  %1892 = vmatpush.msra.mxu0 %v1589
  %1893 = vmatpush.msra.mxu0 %v1586
  %1894 = vmatpush.msra.mxu0 %v1583
  %1895 = vmatpush.msra.mxu0 %v1580
  %1896 = vmatpush.msra.mxu0 %v1577
  %1897 = vmatpush.msra.mxu0 %v1574
  %1898 = vmatpush.msra.mxu0 %v1571
  %1899 = vmatpush.msra.mxu0 %v1568
  %1900 = vmatpush.msra.mxu0 %v1565
  %1901 = vmatpush.msra.mxu0 %v1562
  %1902 = vmatmul.f32.gmra.mxu0 %v1458
  %v1903 = vpop.f32.mrf.mxu0
  %v1904 = vadd.f32 %v1881, %v1903
  %1905 = vmatmul.f32.gmra.mxu0 %v1462
  %v1906 = vpop.f32.mrf.mxu0
  %v1907 = vadd.f32 %v1884, %v1906
  %1908 = vdwg.mxu0
  %1909 = vmatpush.msra.mxu0 %v1655
  %1910 = vmatpush.msra.mxu0 %v1652
  %1911 = vmatpush.msra.mxu0 %v1649
  %1912 = vmatpush.msra.mxu0 %v1646
  %1913 = vmatpush.msra.mxu0 %v1643
  %1914 = vmatpush.msra.mxu0 %v1640
  %1915 = vmatpush.msra.mxu0 %v1637
  %1916 = vmatpush.msra.mxu0 %v1634
  %1917 = vmatpush.msra.mxu0 %v1631
  %1918 = vmatpush.msra.mxu0 %v1628
  %1919 = vmatpush.msra.mxu0 %v1625
  %1920 = vmatpush.msra.mxu0 %v1622
  %1921 = vmatpush.msra.mxu0 %v1619
  %1922 = vmatpush.msra.mxu0 %v1616
  %1923 = vmatpush.msra.mxu0 %v1613
  %1924 = vmatpush.msra.mxu0 %v1610
  %1925 = vmatmul.f32.gmra.mxu0 %v1459
  %v1926 = vpop.f32.mrf.mxu0
  %v1927 = vadd.f32 %v1904, %v1926
  %1928 = vmatmul.f32.gmra.mxu0 %v1463
  %v1929 = vpop.f32.mrf.mxu0
  %v1930 = vadd.f32 %v1907, %v1929
  %1931 = vdwg.mxu0
  %v1934 = vrot.slane %v1835, 7
  %v1935 = vrot.slane %v1838, 7
  %v1936 = vsel %vm236, %v1934, %v1935
  %v1939 = vsel %vm236, 0.0, %v1934
  %v1940 = vmul.f32 %v1939, %v116
  %v1941 = vmul.f32 %v1936, %v117
  %v1942 = vadd.f32 %v1743, %v1940
  %v1943 = vadd.f32 %v1746, %v1941
  %v1946 = vrot.slane %v1927, 1
  %v1947 = vrot.slane %v1930, 1
  %v1948 = vsel %vm1396, %v1946, %v1947
  %v1951 = vsel %vm1417, %v1947, 0.0
  %v1952 = vmul.f32 %v1948, %v122
  %v1953 = vmul.f32 %v1951, %v123
  %v1954 = vadd.f32 %v1942, %v1952
  %v1955 = vadd.f32 %v1943, %v1953
  %v1956 = vld [vmem:[%s9] sm:$0x1]
  %v1958 = vperm.slane %v1956, 0
  %v1960 = vadd.f32 %v1954, %v1958
  %v1961 = vadd.f32 %v1955, %v1958
  %v1962 = vmax.f32 %v1960, 0.0
  %v1963 = vmax.f32 %v1961, 0.0
  %1964 = vst [vmem:[%s10] sm:$0xff] %v1962
  %1965 = vst [vmem:[%s10 + $0x8] sm:$0x3f] %v1963
  // Predicated region
  $region42: #{decoder2_forward.1} parent=0 // pred_check
    _
  $region43: #{decoder2_forward.1} parent=0 // pred_check_branch
    %1967 = sbr.rel (0) target = $region45
  $region44: #{decoder2_forward.1} parent=0 // pred_region
    _
  $region45: #{decoder2_forward.1} parent=0 // pred_fallthru
    _
  // Predicated region
  $region46: #{decoder2_forward.1} parent=0 // pred_check
    _
  $region47: #{decoder2_forward.1} parent=0 // pred_check_branch
    %1969 = sbr.rel (0) target = $region49
  $region48: #{decoder2_forward.1} parent=0 // pred_region
    _
  $region49: #{decoder2_forward.1} parent=0 // pred_fallthru
    _

</llo_original>
